<compile_context>
chip_gen: v5e
topology: v5e:2x2
jax: 0.10.0
libtpu: 0.0.40
codegen_flags: <defaults>
</compile_context>

<pallas_src>
import jax
import jax.numpy as jnp
from jax.experimental import pallas as pl
from jax.experimental.pallas import tpu as pltpu

NUM_INPUTS = 4
NUM_OUTPUTS = 3
HIDDEN = [256, 128, 64, 32, 16]


def mlp_kernel(x_ref,
               w1, b1, w2, b2, w3, b3, w4, b4, w5, b5, w6, b6,
               o_ref):
    """Whole 6-layer MLP forward for one batch tile, entirely in VMEM.

    x / weights / inter-layer activations are bf16 (MXU-native on v6e/v7x);
    accumulation and the bias+ReLU epilogue stay in f32.
    """
    y = x_ref[...]  # bf16 (tile, 4)

    def linear_relu(y, w_ref, b_ref):
        z = jnp.dot(y, w_ref[...], preferred_element_type=jnp.float32)
        z = jnp.maximum(z + b_ref[...], 0.0)
        return z.astype(jnp.bfloat16)      # bf16 operand for the next MXU pass

    y = linear_relu(y, w1, b1)
    y = linear_relu(y, w2, b2)
    y = linear_relu(y, w3, b3)
    y = linear_relu(y, w4, b4)
    y = linear_relu(y, w5, b5)
    # final layer: no ReLU, write f32
    z = jnp.dot(y, w6[...], preferred_element_type=jnp.float32) + b6[...]
    o_ref[...] = z.astype(o_ref.dtype)


def init_params(key):
    """Deterministic parameter init mimicking nn.Linear default (uniform +-1/sqrt(fan_in))."""
    dims = [NUM_INPUTS] + HIDDEN + [NUM_OUTPUTS]
    params = []
    for i in range(len(dims) - 1):
        fan_in, fan_out = dims[i], dims[i + 1]
        key, kw, kb = jax.random.split(key, 3)
        bound = 1.0 / jnp.sqrt(jnp.float32(fan_in))
        w = jax.random.uniform(kw, (fan_in, fan_out), jnp.float32, -bound, bound)
        b = jax.random.uniform(kb, (1, fan_out), jnp.float32, -bound, bound)
        params.append((w, b))
    return params


def _round_up(x, m):
    return ((x + m - 1) // m) * m


def forward_nn(x, params, *, batch_tile=512, single_buffer_params=True):
    """6-layer MLP forward via a single fused Pallas kernel.

    batch_tile=512 keeps the MXU M-dimension full on v5e/v6e/v7x while the
    per-step working set stays ~1-2 MiB, far under every generation's scoped
    VMEM default (no vmem_limit_bytes needed). Weights (~90 KiB in bf16) stay
    resident in VMEM across the whole grid.
    """
    B, F = x.shape
    assert F == NUM_INPUTS

    # Effective tile: at most batch_tile, at least 8 (sublane aligned), and
    # small enough that the grid keeps >= 2 steps whenever B >= 16 (v7x
    # megacore sharding via dimension_semantics=("parallel",)).
    tile = min(batch_tile, max(8, _round_up((B + 1) // 2, 8)))
    B_pad = _round_up(B, tile)
    if B_pad != B:
        x = jnp.pad(x, ((0, B_pad - B), (0, 0)))
    grid = (B_pad // tile,)

    # bf16 activations/weights feed the MXU natively on v6e/v7x; biases stay f32.
    x_bf16 = x.astype(jnp.bfloat16)
    flat_params = []
    for w, b in params:
        flat_params.extend([w.astype(jnp.bfloat16), b])

    def run(single_buffer):
        # Weights & biases use a constant index_map (0, 0): DMA'd once, then
        # resident every grid step. Single-buffering skips the useless second
        # VMEM copy of each parameter.
        param_specs = []
        for p in flat_params:
            if single_buffer:
                spec = pl.BlockSpec(p.shape, lambda i: (0, 0),
                                    pipeline_mode=pl.Buffered(1))
            else:
                spec = pl.BlockSpec(p.shape, lambda i: (0, 0))
            param_specs.append(spec)

        return pl.pallas_call(
            mlp_kernel,
            out_shape=jax.ShapeDtypeStruct((B_pad, NUM_OUTPUTS), jnp.float32),
            grid_spec=pltpu.PrefetchScalarGridSpec(
                num_scalar_prefetch=0,
                grid=grid,
                in_specs=[pl.BlockSpec((tile, F), lambda i: (i, 0))] + param_specs,
                out_specs=pl.BlockSpec((tile, NUM_OUTPUTS), lambda i: (i, 0)),
            ),
            compiler_params=pltpu.CompilerParams(
                dimension_semantics=("parallel",)),
        )(x_bf16, *flat_params)

    if single_buffer_params:
        try:
            out = run(True)
        except Exception:
            # pl.Buffered(1) not accepted by this jax version's grid pipeliner;
            # fall back to default double buffering (costs only ~90 KiB VMEM).
            out = run(False)
    else:
        out = run(False)

    return out[:B]


def forward_nn_ref_f32(x, params):
    """Pure-f32 reference matching the PyTorch module."""
    y = x
    for i, (w, b) in enumerate(params):
        y = y @ w + b
        if i < len(params) - 1:
            y = jnp.maximum(y, 0.0)
    return y


def forward_nn_ref_bf16(x, params):
    """Pure-JAX reference with the kernel's bf16-operand / f32-accumulate scheme."""
    y = x.astype(jnp.bfloat16)
    for i, (w, b) in enumerate(params):
        z = jnp.dot(y, w.astype(jnp.bfloat16),
                    preferred_element_type=jnp.float32) + b
        if i < len(params) - 1:
            y = jnp.maximum(z, 0.0).astype(jnp.bfloat16)
        else:
            y = z
    return y


if __name__ == "__main__":
    key = jax.random.PRNGKey(0)
    kx, kp = jax.random.split(key)

    B = 200  # small batch; not a multiple of the tile -> exercises padding path
    x = jax.random.normal(kx, (B, NUM_INPUTS), jnp.float32)
    params = init_params(kp)

    out = forward_nn(x, params)
    out = jax.block_until_ready(out)
    assert out.shape == (B, NUM_OUTPUTS)

    # Matched-precision reference (bf16 MXU operands, f32 accumulate).
    ref_bf16 = forward_nn_ref_bf16(x, params)
    assert jnp.allclose(out, ref_bf16, atol=2e-3, rtol=2e-3), "mismatch vs bf16 reference"

    # Loose sanity check against the pure-f32 reference (bf16 rounding error only).
    ref_f32 = forward_nn_ref_f32(x, params)
    assert jnp.allclose(out, ref_f32, atol=5e-2, rtol=5e-2), "mismatch vs f32 reference"

    print("KERNEL_OK")
</pallas_src>

<mosaic_0001>
module attributes {stable_mosaic.version = 11 : i64} {
  func.func @mlp_kernel(%arg0: i32, %arg1: memref<104x4xbf16, #tpu.memory_space<vmem>>, %arg2: memref<4x256xbf16, #tpu.memory_space<vmem>>, %arg3: memref<1x256xf32, #tpu.memory_space<vmem>>, %arg4: memref<256x128xbf16, #tpu.memory_space<vmem>>, %arg5: memref<1x128xf32, #tpu.memory_space<vmem>>, %arg6: memref<128x64xbf16, #tpu.memory_space<vmem>>, %arg7: memref<1x64xf32, #tpu.memory_space<vmem>>, %arg8: memref<64x32xbf16, #tpu.memory_space<vmem>>, %arg9: memref<1x32xf32, #tpu.memory_space<vmem>>, %arg10: memref<32x16xbf16, #tpu.memory_space<vmem>>, %arg11: memref<1x16xf32, #tpu.memory_space<vmem>>, %arg12: memref<16x3xbf16, #tpu.memory_space<vmem>>, %arg13: memref<1x3xf32, #tpu.memory_space<vmem>>, %arg14: memref<104x3xf32, #tpu.memory_space<vmem>>) attributes {dimension_semantics = [#tpu.dimension_semantics<parallel>], iteration_bounds = array<i64: 2>, scalar_prefetch = 0 : i64, scratch_operands = 0 : i64, tpu.core_type = #tpu.core_type<tc>, window_params = [{transform_indices = @transform_0, window_bounds = array<i64: 104, 4>}, {pipeline_mode = #tpu.pipeline_mode<synchronous>, transform_indices = @transform_1, window_bounds = array<i64: 4, 256>}, {pipeline_mode = #tpu.pipeline_mode<synchronous>, transform_indices = @transform_2, window_bounds = array<i64: 1, 256>}, {pipeline_mode = #tpu.pipeline_mode<synchronous>, transform_indices = @transform_3, window_bounds = array<i64: 256, 128>}, {pipeline_mode = #tpu.pipeline_mode<synchronous>, transform_indices = @transform_4, window_bounds = array<i64: 1, 128>}, {pipeline_mode = #tpu.pipeline_mode<synchronous>, transform_indices = @transform_5, window_bounds = array<i64: 128, 64>}, {pipeline_mode = #tpu.pipeline_mode<synchronous>, transform_indices = @transform_6, window_bounds = array<i64: 1, 64>}, {pipeline_mode = #tpu.pipeline_mode<synchronous>, transform_indices = @transform_7, window_bounds = array<i64: 64, 32>}, {pipeline_mode = #tpu.pipeline_mode<synchronous>, transform_indices = @transform_8, window_bounds = array<i64: 1, 32>}, {pipeline_mode = #tpu.pipeline_mode<synchronous>, transform_indices = @transform_9, window_bounds = array<i64: 32, 16>}, {pipeline_mode = #tpu.pipeline_mode<synchronous>, transform_indices = @transform_10, window_bounds = array<i64: 1, 16>}, {pipeline_mode = #tpu.pipeline_mode<synchronous>, transform_indices = @transform_11, window_bounds = array<i64: 16, 3>}, {pipeline_mode = #tpu.pipeline_mode<synchronous>, transform_indices = @transform_12, window_bounds = array<i64: 1, 3>}, {transform_indices = @transform_13, window_bounds = array<i64: 104, 3>}]} {
    %c0 = arith.constant 0 : index
    %c0_0 = arith.constant 0 : index
    %0 = vector.load %arg1[%c0, %c0_0] : memref<104x4xbf16, #tpu.memory_space<vmem>>, vector<104x4xbf16>
    %c0_1 = arith.constant 0 : index
    %c0_2 = arith.constant 0 : index
    %1 = vector.load %arg2[%c0_1, %c0_2] : memref<4x256xbf16, #tpu.memory_space<vmem>>, vector<4x256xbf16>
    %cst = arith.constant dense<0.000000e+00> : vector<104x256xf32>
    %2 = tpu.matmul %0, %1, %cst {dimension_numbers = #tpu.dot_dimension_numbers<[1], [0], [0], [1], [0, 0, 1, 1], [], []>} : vector<104x4xbf16>, vector<4x256xbf16>, vector<104x256xf32> -> vector<104x256xf32>
    %c0_3 = arith.constant 0 : index
    %c0_4 = arith.constant 0 : index
    %3 = vector.load %arg3[%c0_3, %c0_4] : memref<1x256xf32, #tpu.memory_space<vmem>>, vector<1x256xf32>
    %4 = vector.broadcast %3 : vector<1x256xf32> to vector<104x256xf32>
    %5 = arith.addf %2, %4 : vector<104x256xf32>
    %cst_5 = arith.constant 0.000000e+00 : f32
    %6 = vector.broadcast %cst_5 : f32 to vector<104x256xf32>
    %7 = arith.maximumf %5, %6 : vector<104x256xf32>
    %8 = arith.truncf %7 : vector<104x256xf32> to vector<104x256xbf16>
    %c0_6 = arith.constant 0 : index
    %c0_7 = arith.constant 0 : index
    %9 = vector.load %arg4[%c0_6, %c0_7] : memref<256x128xbf16, #tpu.memory_space<vmem>>, vector<256x128xbf16>
    %cst_8 = arith.constant dense<0.000000e+00> : vector<104x128xf32>
    %10 = tpu.matmul %8, %9, %cst_8 {dimension_numbers = #tpu.dot_dimension_numbers<[1], [0], [0], [1], [0, 0, 1, 1], [], []>} : vector<104x256xbf16>, vector<256x128xbf16>, vector<104x128xf32> -> vector<104x128xf32>
    %c0_9 = arith.constant 0 : index
    %c0_10 = arith.constant 0 : index
    %11 = vector.load %arg5[%c0_9, %c0_10] : memref<1x128xf32, #tpu.memory_space<vmem>>, vector<1x128xf32>
    %12 = vector.broadcast %11 : vector<1x128xf32> to vector<104x128xf32>
    %13 = arith.addf %10, %12 : vector<104x128xf32>
    %cst_11 = arith.constant 0.000000e+00 : f32
    %14 = vector.broadcast %cst_11 : f32 to vector<104x128xf32>
    %15 = arith.maximumf %13, %14 : vector<104x128xf32>
    %16 = arith.truncf %15 : vector<104x128xf32> to vector<104x128xbf16>
    %c0_12 = arith.constant 0 : index
    %c0_13 = arith.constant 0 : index
    %17 = vector.load %arg6[%c0_12, %c0_13] : memref<128x64xbf16, #tpu.memory_space<vmem>>, vector<128x64xbf16>
    %cst_14 = arith.constant dense<0.000000e+00> : vector<104x64xf32>
    %18 = tpu.matmul %16, %17, %cst_14 {dimension_numbers = #tpu.dot_dimension_numbers<[1], [0], [0], [1], [0, 0, 1, 1], [], []>} : vector<104x128xbf16>, vector<128x64xbf16>, vector<104x64xf32> -> vector<104x64xf32>
    %c0_15 = arith.constant 0 : index
    %c0_16 = arith.constant 0 : index
    %19 = vector.load %arg7[%c0_15, %c0_16] : memref<1x64xf32, #tpu.memory_space<vmem>>, vector<1x64xf32>
    %20 = vector.broadcast %19 : vector<1x64xf32> to vector<104x64xf32>
    %21 = arith.addf %18, %20 : vector<104x64xf32>
    %cst_17 = arith.constant 0.000000e+00 : f32
    %22 = vector.broadcast %cst_17 : f32 to vector<104x64xf32>
    %23 = arith.maximumf %21, %22 : vector<104x64xf32>
    %24 = arith.truncf %23 : vector<104x64xf32> to vector<104x64xbf16>
    %c0_18 = arith.constant 0 : index
    %c0_19 = arith.constant 0 : index
    %25 = vector.load %arg8[%c0_18, %c0_19] : memref<64x32xbf16, #tpu.memory_space<vmem>>, vector<64x32xbf16>
    %cst_20 = arith.constant dense<0.000000e+00> : vector<104x32xf32>
    %26 = tpu.matmul %24, %25, %cst_20 {dimension_numbers = #tpu.dot_dimension_numbers<[1], [0], [0], [1], [0, 0, 1, 1], [], []>} : vector<104x64xbf16>, vector<64x32xbf16>, vector<104x32xf32> -> vector<104x32xf32>
    %c0_21 = arith.constant 0 : index
    %c0_22 = arith.constant 0 : index
    %27 = vector.load %arg9[%c0_21, %c0_22] : memref<1x32xf32, #tpu.memory_space<vmem>>, vector<1x32xf32>
    %28 = vector.broadcast %27 : vector<1x32xf32> to vector<104x32xf32>
    %29 = arith.addf %26, %28 : vector<104x32xf32>
    %cst_23 = arith.constant 0.000000e+00 : f32
    %30 = vector.broadcast %cst_23 : f32 to vector<104x32xf32>
    %31 = arith.maximumf %29, %30 : vector<104x32xf32>
    %32 = arith.truncf %31 : vector<104x32xf32> to vector<104x32xbf16>
    %c0_24 = arith.constant 0 : index
    %c0_25 = arith.constant 0 : index
    %33 = vector.load %arg10[%c0_24, %c0_25] : memref<32x16xbf16, #tpu.memory_space<vmem>>, vector<32x16xbf16>
    %cst_26 = arith.constant dense<0.000000e+00> : vector<104x16xf32>
    %34 = tpu.matmul %32, %33, %cst_26 {dimension_numbers = #tpu.dot_dimension_numbers<[1], [0], [0], [1], [0, 0, 1, 1], [], []>} : vector<104x32xbf16>, vector<32x16xbf16>, vector<104x16xf32> -> vector<104x16xf32>
    %c0_27 = arith.constant 0 : index
    %c0_28 = arith.constant 0 : index
    %35 = vector.load %arg11[%c0_27, %c0_28] : memref<1x16xf32, #tpu.memory_space<vmem>>, vector<1x16xf32>
    %36 = vector.broadcast %35 : vector<1x16xf32> to vector<104x16xf32>
    %37 = arith.addf %34, %36 : vector<104x16xf32>
    %cst_29 = arith.constant 0.000000e+00 : f32
    %38 = vector.broadcast %cst_29 : f32 to vector<104x16xf32>
    %39 = arith.maximumf %37, %38 : vector<104x16xf32>
    %40 = arith.truncf %39 : vector<104x16xf32> to vector<104x16xbf16>
    %c0_30 = arith.constant 0 : index
    %c0_31 = arith.constant 0 : index
    %41 = vector.load %arg12[%c0_30, %c0_31] : memref<16x3xbf16, #tpu.memory_space<vmem>>, vector<16x3xbf16>
    %cst_32 = arith.constant dense<0.000000e+00> : vector<104x3xf32>
    %42 = tpu.matmul %40, %41, %cst_32 {dimension_numbers = #tpu.dot_dimension_numbers<[1], [0], [0], [1], [0, 0, 1, 1], [], []>} : vector<104x16xbf16>, vector<16x3xbf16>, vector<104x3xf32> -> vector<104x3xf32>
    %c0_33 = arith.constant 0 : index
    %c0_34 = arith.constant 0 : index
    %43 = vector.load %arg13[%c0_33, %c0_34] : memref<1x3xf32, #tpu.memory_space<vmem>>, vector<1x3xf32>
    %44 = vector.broadcast %43 : vector<1x3xf32> to vector<104x3xf32>
    %45 = arith.addf %42, %44 : vector<104x3xf32>
    %c0_35 = arith.constant 0 : index
    %c0_36 = arith.constant 0 : index
    %46 = vector.load %arg14[%c0_35, %c0_36] : memref<104x3xf32, #tpu.memory_space<vmem>>, vector<104x3xf32>
    tpu.vector_store %arg14[%c0_35, %c0_36], %45 {strides = array<i32>} : memref<104x3xf32, #tpu.memory_space<vmem>>, vector<104x3xf32>,
    return
  }
  func.func @transform_0(%arg0: i32) -> (i32, i32) {
    %c0_i32 = arith.constant 0 : i32
    %c0_i32_0 = arith.constant 0 : i32
    return %arg0, %c0_i32 : i32, i32
  }
  func.func @transform_1(%arg0: i32) -> (i32, i32) {
    %c0_i32 = arith.constant 0 : i32
    %c0_i32_0 = arith.constant 0 : i32
    %c0_i32_1 = arith.constant 0 : i32
    return %c0_i32, %c0_i32_0 : i32, i32
  }
  func.func @transform_2(%arg0: i32) -> (i32, i32) {
    %c0_i32 = arith.constant 0 : i32
    %c0_i32_0 = arith.constant 0 : i32
    %c0_i32_1 = arith.constant 0 : i32
    return %c0_i32, %c0_i32_0 : i32, i32
  }
  func.func @transform_3(%arg0: i32) -> (i32, i32) {
    %c0_i32 = arith.constant 0 : i32
    %c0_i32_0 = arith.constant 0 : i32
    %c0_i32_1 = arith.constant 0 : i32
    return %c0_i32, %c0_i32_0 : i32, i32
  }
  func.func @transform_4(%arg0: i32) -> (i32, i32) {
    %c0_i32 = arith.constant 0 : i32
    %c0_i32_0 = arith.constant 0 : i32
    %c0_i32_1 = arith.constant 0 : i32
    return %c0_i32, %c0_i32_0 : i32, i32
  }
  func.func @transform_5(%arg0: i32) -> (i32, i32) {
    %c0_i32 = arith.constant 0 : i32
    %c0_i32_0 = arith.constant 0 : i32
    %c0_i32_1 = arith.constant 0 : i32
    return %c0_i32, %c0_i32_0 : i32, i32
  }
  func.func @transform_6(%arg0: i32) -> (i32, i32) {
    %c0_i32 = arith.constant 0 : i32
    %c0_i32_0 = arith.constant 0 : i32
    %c0_i32_1 = arith.constant 0 : i32
    return %c0_i32, %c0_i32_0 : i32, i32
  }
  func.func @transform_7(%arg0: i32) -> (i32, i32) {
    %c0_i32 = arith.constant 0 : i32
    %c0_i32_0 = arith.constant 0 : i32
    %c0_i32_1 = arith.constant 0 : i32
    return %c0_i32, %c0_i32_0 : i32, i32
  }
  func.func @transform_8(%arg0: i32) -> (i32, i32) {
    %c0_i32 = arith.constant 0 : i32
    %c0_i32_0 = arith.constant 0 : i32
    %c0_i32_1 = arith.constant 0 : i32
    return %c0_i32, %c0_i32_0 : i32, i32
  }
  func.func @transform_9(%arg0: i32) -> (i32, i32) {
    %c0_i32 = arith.constant 0 : i32
    %c0_i32_0 = arith.constant 0 : i32
    %c0_i32_1 = arith.constant 0 : i32
    return %c0_i32, %c0_i32_0 : i32, i32
  }
  func.func @transform_10(%arg0: i32) -> (i32, i32) {
    %c0_i32 = arith.constant 0 : i32
    %c0_i32_0 = arith.constant 0 : i32
    %c0_i32_1 = arith.constant 0 : i32
    return %c0_i32, %c0_i32_0 : i32, i32
  }
  func.func @transform_11(%arg0: i32) -> (i32, i32) {
    %c0_i32 = arith.constant 0 : i32
    %c0_i32_0 = arith.constant 0 : i32
    %c0_i32_1 = arith.constant 0 : i32
    return %c0_i32, %c0_i32_0 : i32, i32
  }
  func.func @transform_12(%arg0: i32) -> (i32, i32) {
    %c0_i32 = arith.constant 0 : i32
    %c0_i32_0 = arith.constant 0 : i32
    %c0_i32_1 = arith.constant 0 : i32
    return %c0_i32, %c0_i32_0 : i32, i32
  }
  func.func @transform_13(%arg0: i32) -> (i32, i32) {
    %c0_i32 = arith.constant 0 : i32
    %c0_i32_0 = arith.constant 0 : i32
    return %arg0, %c0_i32 : i32, i32
  }
}

module attributes {stable_mosaic.version = 11 : i64} {
  func.func @mlp_kernel(%arg0: i32, %arg1: memref<104x4xbf16, #tpu.memory_space<vmem>>, %arg2: memref<4x256xbf16, #tpu.memory_space<vmem>>, %arg3: memref<1x256xf32, #tpu.memory_space<vmem>>, %arg4: memref<256x128xbf16, #tpu.memory_space<vmem>>, %arg5: memref<1x128xf32, #tpu.memory_space<vmem>>, %arg6: memref<128x64xbf16, #tpu.memory_space<vmem>>, %arg7: memref<1x64xf32, #tpu.memory_space<vmem>>, %arg8: memref<64x32xbf16, #tpu.memory_space<vmem>>, %arg9: memref<1x32xf32, #tpu.memory_space<vmem>>, %arg10: memref<32x16xbf16, #tpu.memory_space<vmem>>, %arg11: memref<1x16xf32, #tpu.memory_space<vmem>>, %arg12: memref<16x3xbf16, #tpu.memory_space<vmem>>, %arg13: memref<1x3xf32, #tpu.memory_space<vmem>>, %arg14: memref<104x3xf32, #tpu.memory_space<vmem>>) attributes {dimension_semantics = [#tpu.dimension_semantics<parallel>], iteration_bounds = array<i64: 2>, scalar_prefetch = 0 : i64, scratch_operands = 0 : i64, tpu.core_type = #tpu.core_type<tc>, window_params = [{transform_indices = @transform_0, window_bounds = array<i64: 104, 4>}, {pipeline_mode = #tpu.pipeline_mode<synchronous>, transform_indices = @transform_1, window_bounds = array<i64: 4, 256>}, {pipeline_mode = #tpu.pipeline_mode<synchronous>, transform_indices = @transform_2, window_bounds = array<i64: 1, 256>}, {pipeline_mode = #tpu.pipeline_mode<synchronous>, transform_indices = @transform_3, window_bounds = array<i64: 256, 128>}, {pipeline_mode = #tpu.pipeline_mode<synchronous>, transform_indices = @transform_4, window_bounds = array<i64: 1, 128>}, {pipeline_mode = #tpu.pipeline_mode<synchronous>, transform_indices = @transform_5, window_bounds = array<i64: 128, 64>}, {pipeline_mode = #tpu.pipeline_mode<synchronous>, transform_indices = @transform_6, window_bounds = array<i64: 1, 64>}, {pipeline_mode = #tpu.pipeline_mode<synchronous>, transform_indices = @transform_7, window_bounds = array<i64: 64, 32>}, {pipeline_mode = #tpu.pipeline_mode<synchronous>, transform_indices = @transform_8, window_bounds = array<i64: 1, 32>}, {pipeline_mode = #tpu.pipeline_mode<synchronous>, transform_indices = @transform_9, window_bounds = array<i64: 32, 16>}, {pipeline_mode = #tpu.pipeline_mode<synchronous>, transform_indices = @transform_10, window_bounds = array<i64: 1, 16>}, {pipeline_mode = #tpu.pipeline_mode<synchronous>, transform_indices = @transform_11, window_bounds = array<i64: 16, 3>}, {pipeline_mode = #tpu.pipeline_mode<synchronous>, transform_indices = @transform_12, window_bounds = array<i64: 1, 3>}, {transform_indices = @transform_13, window_bounds = array<i64: 104, 3>}]} {
    %c0 = arith.constant 0 : index
    %c0_0 = arith.constant 0 : index
    %0 = vector.load %arg1[%c0, %c0_0] : memref<104x4xbf16, #tpu.memory_space<vmem>>, vector<104x4xbf16>
    %c0_1 = arith.constant 0 : index
    %c0_2 = arith.constant 0 : index
    %1 = vector.load %arg2[%c0_1, %c0_2] : memref<4x256xbf16, #tpu.memory_space<vmem>>, vector<4x256xbf16>
    %cst = arith.constant dense<0.000000e+00> : vector<104x256xf32>
    %2 = tpu.matmul %0, %1, %cst {dimension_numbers = #tpu.dot_dimension_numbers<[1], [0], [0], [1], [0, 0, 1, 1], [], []>} : vector<104x4xbf16>, vector<4x256xbf16>, vector<104x256xf32> -> vector<104x256xf32>
    %c0_3 = arith.constant 0 : index
    %c0_4 = arith.constant 0 : index
    %3 = vector.load %arg3[%c0_3, %c0_4] : memref<1x256xf32, #tpu.memory_space<vmem>>, vector<1x256xf32>
    %4 = vector.broadcast %3 : vector<1x256xf32> to vector<104x256xf32>
    %5 = arith.addf %2, %4 : vector<104x256xf32>
    %cst_5 = arith.constant 0.000000e+00 : f32
    %6 = vector.broadcast %cst_5 : f32 to vector<104x256xf32>
    %7 = arith.maximumf %5, %6 : vector<104x256xf32>
    %8 = arith.truncf %7 : vector<104x256xf32> to vector<104x256xbf16>
    %c0_6 = arith.constant 0 : index
    %c0_7 = arith.constant 0 : index
    %9 = vector.load %arg4[%c0_6, %c0_7] : memref<256x128xbf16, #tpu.memory_space<vmem>>, vector<256x128xbf16>
    %cst_8 = arith.constant dense<0.000000e+00> : vector<104x128xf32>
    %10 = tpu.matmul %8, %9, %cst_8 {dimension_numbers = #tpu.dot_dimension_numbers<[1], [0], [0], [1], [0, 0, 1, 1], [], []>} : vector<104x256xbf16>, vector<256x128xbf16>, vector<104x128xf32> -> vector<104x128xf32>
    %c0_9 = arith.constant 0 : index
    %c0_10 = arith.constant 0 : index
    %11 = vector.load %arg5[%c0_9, %c0_10] : memref<1x128xf32, #tpu.memory_space<vmem>>, vector<1x128xf32>
    %12 = vector.broadcast %11 : vector<1x128xf32> to vector<104x128xf32>
    %13 = arith.addf %10, %12 : vector<104x128xf32>
    %cst_11 = arith.constant 0.000000e+00 : f32
    %14 = vector.broadcast %cst_11 : f32 to vector<104x128xf32>
    %15 = arith.maximumf %13, %14 : vector<104x128xf32>
    %16 = arith.truncf %15 : vector<104x128xf32> to vector<104x128xbf16>
    %c0_12 = arith.constant 0 : index
    %c0_13 = arith.constant 0 : index
    %17 = vector.load %arg6[%c0_12, %c0_13] : memref<128x64xbf16, #tpu.memory_space<vmem>>, vector<128x64xbf16>
    %cst_14 = arith.constant dense<0.000000e+00> : vector<104x64xf32>
    %18 = tpu.matmul %16, %17, %cst_14 {dimension_numbers = #tpu.dot_dimension_numbers<[1], [0], [0], [1], [0, 0, 1, 1], [], []>} : vector<104x128xbf16>, vector<128x64xbf16>, vector<104x64xf32> -> vector<104x64xf32>
    %c0_15 = arith.constant 0 : index
    %c0_16 = arith.constant 0 : index
    %19 = vector.load %arg7[%c0_15, %c0_16] : memref<1x64xf32, #tpu.memory_space<vmem>>, vector<1x64xf32>
    %20 = vector.broadcast %19 : vector<1x64xf32> to vector<104x64xf32>
    %21 = arith.addf %18, %20 : vector<104x64xf32>
    %cst_17 = arith.constant 0.000000e+00 : f32
    %22 = vector.broadcast %cst_17 : f32 to vector<104x64xf32>
    %23 = arith.maximumf %21, %22 : vector<104x64xf32>
    %24 = arith.truncf %23 : vector<104x64xf32> to vector<104x64xbf16>
    %c0_18 = arith.constant 0 : index
    %c0_19 = arith.constant 0 : index
    %25 = vector.load %arg8[%c0_18, %c0_19] : memref<64x32xbf16, #tpu.memory_space<vmem>>, vector<64x32xbf16>
    %cst_20 = arith.constant dense<0.000000e+00> : vector<104x32xf32>
    %26 = tpu.matmul %24, %25, %cst_20 {dimension_numbers = #tpu.dot_dimension_numbers<[1], [0], [0], [1], [0, 0, 1, 1], [], []>} : vector<104x64xbf16>, vector<64x32xbf16>, vector<104x32xf32> -> vector<104x32xf32>
    %c0_21 = arith.constant 0 : index
    %c0_22 = arith.constant 0 : index
    %27 = vector.load %arg9[%c0_21, %c0_22] : memref<1x32xf32, #tpu.memory_space<vmem>>, vector<1x32xf32>
    %28 = vector.broadcast %27 : vector<1x32xf32> to vector<104x32xf32>
    %29 = arith.addf %26, %28 : vector<104x32xf32>
    %cst_23 = arith.constant 0.000000e+00 : f32
    %30 = vector.broadcast %cst_23 : f32 to vector<104x32xf32>
    %31 = arith.maximumf %29, %30 : vector<104x32xf32>
    %32 = arith.truncf %31 : vector<104x32xf32> to vector<104x32xbf16>
    %c0_24 = arith.constant 0 : index
    %c0_25 = arith.constant 0 : index
    %33 = vector.load %arg10[%c0_24, %c0_25] : memref<32x16xbf16, #tpu.memory_space<vmem>>, vector<32x16xbf16>
    %cst_26 = arith.constant dense<0.000000e+00> : vector<104x16xf32>
    %34 = tpu.matmul %32, %33, %cst_26 {dimension_numbers = #tpu.dot_dimension_numbers<[1], [0], [0], [1], [0, 0, 1, 1], [], []>} : vector<104x32xbf16>, vector<32x16xbf16>, vector<104x16xf32> -> vector<104x16xf32>
    %c0_27 = arith.constant 0 : index
    %c0_28 = arith.constant 0 : index
    %35 = vector.load %arg11[%c0_27, %c0_28] : memref<1x16xf32, #tpu.memory_space<vmem>>, vector<1x16xf32>
    %36 = vector.broadcast %35 : vector<1x16xf32> to vector<104x16xf32>
    %37 = arith.addf %34, %36 : vector<104x16xf32>
    %cst_29 = arith.constant 0.000000e+00 : f32
    %38 = vector.broadcast %cst_29 : f32 to vector<104x16xf32>
    %39 = arith.maximumf %37, %38 : vector<104x16xf32>
    %40 = arith.truncf %39 : vector<104x16xf32> to vector<104x16xbf16>
    %c0_30 = arith.constant 0 : index
    %c0_31 = arith.constant 0 : index
    %41 = vector.load %arg12[%c0_30, %c0_31] : memref<16x3xbf16, #tpu.memory_space<vmem>>, vector<16x3xbf16>
    %cst_32 = arith.constant dense<0.000000e+00> : vector<104x3xf32>
    %42 = tpu.matmul %40, %41, %cst_32 {dimension_numbers = #tpu.dot_dimension_numbers<[1], [0], [0], [1], [0, 0, 1, 1], [], []>} : vector<104x16xbf16>, vector<16x3xbf16>, vector<104x3xf32> -> vector<104x3xf32>
    %c0_33 = arith.constant 0 : index
    %c0_34 = arith.constant 0 : index
    %43 = vector.load %arg13[%c0_33, %c0_34] : memref<1x3xf32, #tpu.memory_space<vmem>>, vector<1x3xf32>
    %44 = vector.broadcast %43 : vector<1x3xf32> to vector<104x3xf32>
    %45 = arith.addf %42, %44 : vector<104x3xf32>
    %c0_35 = arith.constant 0 : index
    %c0_36 = arith.constant 0 : index
    %46 = vector.load %arg14[%c0_35, %c0_36] : memref<104x3xf32, #tpu.memory_space<vmem>>, vector<104x3xf32>
    tpu.vector_store %arg14[%c0_35, %c0_36], %45 {strides = array<i32>} : memref<104x3xf32, #tpu.memory_space<vmem>>, vector<104x3xf32>,
    return
  }
  func.func @transform_0(%arg0: i32) -> (i32, i32) {
    %c0_i32 = arith.constant 0 : i32
    %c0_i32_0 = arith.constant 0 : i32
    return %arg0, %c0_i32 : i32, i32
  }
  func.func @transform_1(%arg0: i32) -> (i32, i32) {
    %c0_i32 = arith.constant 0 : i32
    %c0_i32_0 = arith.constant 0 : i32
    %c0_i32_1 = arith.constant 0 : i32
    return %c0_i32, %c0_i32_0 : i32, i32
  }
  func.func @transform_2(%arg0: i32) -> (i32, i32) {
    %c0_i32 = arith.constant 0 : i32
    %c0_i32_0 = arith.constant 0 : i32
    %c0_i32_1 = arith.constant 0 : i32
    return %c0_i32, %c0_i32_0 : i32, i32
  }
  func.func @transform_3(%arg0: i32) -> (i32, i32) {
    %c0_i32 = arith.constant 0 : i32
    %c0_i32_0 = arith.constant 0 : i32
    %c0_i32_1 = arith.constant 0 : i32
    return %c0_i32, %c0_i32_0 : i32, i32
  }
  func.func @transform_4(%arg0: i32) -> (i32, i32) {
    %c0_i32 = arith.constant 0 : i32
    %c0_i32_0 = arith.constant 0 : i32
    %c0_i32_1 = arith.constant 0 : i32
    return %c0_i32, %c0_i32_0 : i32, i32
  }
  func.func @transform_5(%arg0: i32) -> (i32, i32) {
    %c0_i32 = arith.constant 0 : i32
    %c0_i32_0 = arith.constant 0 : i32
    %c0_i32_1 = arith.constant 0 : i32
    return %c0_i32, %c0_i32_0 : i32, i32
  }
  func.func @transform_6(%arg0: i32) -> (i32, i32) {
    %c0_i32 = arith.constant 0 : i32
    %c0_i32_0 = arith.constant 0 : i32
    %c0_i32_1 = arith.constant 0 : i32
    return %c0_i32, %c0_i32_0 : i32, i32
  }
  func.func @transform_7(%arg0: i32) -> (i32, i32) {
    %c0_i32 = arith.constant 0 : i32
    %c0_i32_0 = arith.constant 0 : i32
    %c0_i32_1 = arith.constant 0 : i32
    return %c0_i32, %c0_i32_0 : i32, i32
  }
  func.func @transform_8(%arg0: i32) -> (i32, i32) {
    %c0_i32 = arith.constant 0 : i32
    %c0_i32_0 = arith.constant 0 : i32
    %c0_i32_1 = arith.constant 0 : i32
    return %c0_i32, %c0_i32_0 : i32, i32
  }
  func.func @transform_9(%arg0: i32) -> (i32, i32) {
    %c0_i32 = arith.constant 0 : i32
    %c0_i32_0 = arith.constant 0 : i32
    %c0_i32_1 = arith.constant 0 : i32
    return %c0_i32, %c0_i32_0 : i32, i32
  }
  func.func @transform_10(%arg0: i32) -> (i32, i32) {
    %c0_i32 = arith.constant 0 : i32
    %c0_i32_0 = arith.constant 0 : i32
    %c0_i32_1 = arith.constant 0 : i32
    return %c0_i32, %c0_i32_0 : i32, i32
  }
  func.func @transform_11(%arg0: i32) -> (i32, i32) {
    %c0_i32 = arith.constant 0 : i32
    %c0_i32_0 = arith.constant 0 : i32
    %c0_i32_1 = arith.constant 0 : i32
    return %c0_i32, %c0_i32_0 : i32, i32
  }
  func.func @transform_12(%arg0: i32) -> (i32, i32) {
    %c0_i32 = arith.constant 0 : i32
    %c0_i32_0 = arith.constant 0 : i32
    %c0_i32_1 = arith.constant 0 : i32
    return %c0_i32, %c0_i32_0 : i32, i32
  }
  func.func @transform_13(%arg0: i32) -> (i32, i32) {
    %c0_i32 = arith.constant 0 : i32
    %c0_i32_0 = arith.constant 0 : i32
    return %arg0, %c0_i32 : i32, i32
  }
}

</mosaic_0001>

<llo_original>
// kernel: tpu_custom_call.1
$region0: #{tpu_custom_call.1}
  #allocation0 [shape = 'u32[]', space=smem, size = 0x4, offset = 0x4, fixed_abs, tag = 'smem constant byte address 0x4 - core index']
  #allocation1 [shape = 'u32[72,128]{1,0:T(1,128)}', space=vmem, size = 0x9000, scoped, tag = 'internal scratch']
  %s0 = inlined_call_operand.vmem [shape: bf16[208,4], index: 0, kind: input, shape index: {}]
  %s1 = inlined_call_operand.vmem [shape: bf16[4,256], index: 1, kind: input, shape index: {}]
  %s2 = inlined_call_operand.vmem [shape: f32[1,256], index: 2, kind: input, shape index: {}]
  %s3 = inlined_call_operand.vmem [shape: bf16[256,128], index: 3, kind: input, shape index: {}]
  %s4 = inlined_call_operand.vmem [shape: f32[1,128], index: 4, kind: input, shape index: {}]
  %s5 = inlined_call_operand.vmem [shape: bf16[128,64], index: 5, kind: input, shape index: {}]
  %s6 = inlined_call_operand.vmem [shape: f32[1,64], index: 6, kind: input, shape index: {}]
  %s7 = inlined_call_operand.vmem [shape: bf16[64,32], index: 7, kind: input, shape index: {}]
  %s8 = inlined_call_operand.vmem [shape: f32[1,32], index: 8, kind: input, shape index: {}]
  %s9 = inlined_call_operand.vmem [shape: bf16[32,16], index: 9, kind: input, shape index: {}]
  %s10 = inlined_call_operand.vmem [shape: f32[1,16], index: 10, kind: input, shape index: {}]
  %s11 = inlined_call_operand.vmem [shape: bf16[16,3], index: 11, kind: input, shape index: {}]
  %s12 = inlined_call_operand.vmem [shape: f32[1,3], index: 12, kind: input, shape index: {}]
  %s13 = inlined_call_operand.vmem [shape: f32[208,3], index: 13, kind: output, shape index: {}]
  %s14 = sld [smem:[#allocation0]]
  $region85: #{tpu_custom_call.1} parent=0
    _
  %s16 = ssub.s32 1, %s14
  %s17 = scalar_select 0, %s16, %s14
  loop: start=0, step=1, limit=4
  $region2: #{tpu_custom_call.1} parent=0 // loop_pre_header
    _
  $region3: #{tpu_custom_call.1} parent=0 // loop_header
    %s19 = sphi 0, %s23
    %p20 = scmp.ge.s32.totalorder %s19, 4
    %s29 = sphi 0, %s31
    %s32 = sphi 0, %s29
    %s33 = sphi 0, %s32
    %s49 = sphi 0, %s33
    %s53 = sphi 0, %s53
    %s55 = sphi 0, %s53
    %s56 = sphi 0, %s55
    %s70 = sphi 0, %s56
    %s74 = sphi 0, %s74
    %s76 = sphi 0, %s74
    %s77 = sphi 0, %s76
    %s91 = sphi 0, %s77
    %s95 = sphi 0, %s95
    %s97 = sphi 0, %s95
    %s98 = sphi 0, %s97
    %s112 = sphi 0, %s98
    %s116 = sphi 0, %s116
    %s118 = sphi 0, %s116
    %s119 = sphi 0, %s118
    %s133 = sphi 0, %s119
    %s137 = sphi 0, %s137
    %s139 = sphi 0, %s137
    %s140 = sphi 0, %s139
    %s154 = sphi 0, %s140
    %s158 = sphi 0, %s158
    %s160 = sphi 0, %s158
    %s161 = sphi 0, %s160
    %s175 = sphi 0, %s161
    %s179 = sphi 0, %s179
    %s181 = sphi 0, %s179
    %s182 = sphi 0, %s181
    %s196 = sphi 0, %s182
    %s200 = sphi 0, %s200
    %s202 = sphi 0, %s200
    %s203 = sphi 0, %s202
    %s217 = sphi 0, %s203
    %s221 = sphi 0, %s221
    %s223 = sphi 0, %s221
    %s224 = sphi 0, %s223
    %s238 = sphi 0, %s224
    %s242 = sphi 0, %s242
    %s244 = sphi 0, %s242
    %s245 = sphi 0, %s244
    %s259 = sphi 0, %s245
    %s263 = sphi 0, %s263
    %s265 = sphi 0, %s263
    %s266 = sphi 0, %s265
    %s280 = sphi 0, %s266
    %s284 = sphi 0, %s284
    %s286 = sphi 0, %s284
    %s287 = sphi 0, %s286
    %s301 = sphi 0, %s287
    %s307 = sphi 0, %s309
    %s310 = sphi 0, %s307
    %s311 = sphi 0, %s310
    %s327 = sphi 0, %s311
  $region4: #{tpu_custom_call.1} parent=0 // loop_header_branch
    %22 = sbr.rel (%p20) target = $region8
  $region5: #{tpu_custom_call.1} parent=0 // loop_body
    %s24 = ssub.s32 %s19, 1
    %s25 = ssub.s32 %s19, 2
    %s26 = sadd.s32 %s19, 1
    %s27 = ssub.s32 %s19, %s26
    %p28 = scmp.eq.s32.totalorder %s27, 0
    %s30 = sadd.s32 %s29, 1
    %s31 = scalar_select %p28, %s29, %s30
    %p34 = pneg %p28
    %p35 = scmp.eq.s32.totalorder %s19, 1
    %p36 = por %p34, %p35
    %p37 = scmp.ne.s32.totalorder %s29, %s32
    %p38 = scmp.eq.s32.totalorder %s19, 0
    %p39 = por %p37, %p38
    %p40 = scmp.ne.s32.totalorder %s29, %s32
    %p41 = scmp.eq.s32.totalorder %s24, 1
    %p42 = por %p40, %p41
    %p43 = scmp.ne.s32.totalorder %s32, %s33
    %p44 = scmp.eq.s32.totalorder %s24, 0
    %p45 = por %p43, %p44
    %p46 = scmp.ne.s32.totalorder %s32, %s33
    %p47 = scmp.eq.s32.totalorder %s25, 1
    %p48 = por %p46, %p47
    %p50 = scmp.ne.s32.totalorder %s33, %s49
    %p51 = scmp.eq.s32.totalorder %s25, 0
    %p52 = por %p50, %p51
    %s54 = sadd.s32 %s53, 1
    %p57 = scmp.eq.s32.totalorder %s19, 1
    %p58 = scmp.ne.s32.totalorder %s53, %s55
    %p59 = scmp.eq.s32.totalorder %s19, 0
    %p60 = por %p58, %p59
    %p61 = scmp.ne.s32.totalorder %s53, %s55
    %p62 = scmp.eq.s32.totalorder %s24, 1
    %p63 = por %p61, %p62
    %p64 = scmp.ne.s32.totalorder %s55, %s56
    %p65 = scmp.eq.s32.totalorder %s24, 0
    %p66 = por %p64, %p65
    %p67 = scmp.ne.s32.totalorder %s55, %s56
    %p68 = scmp.eq.s32.totalorder %s25, 1
    %p69 = por %p67, %p68
    %p71 = scmp.ne.s32.totalorder %s56, %s70
    %p72 = scmp.eq.s32.totalorder %s25, 0
    %p73 = por %p71, %p72
    %s75 = sadd.s32 %s74, 1
    %p78 = scmp.eq.s32.totalorder %s19, 1
    %p79 = scmp.ne.s32.totalorder %s74, %s76
    %p80 = scmp.eq.s32.totalorder %s19, 0
    %p81 = por %p79, %p80
    %p82 = scmp.ne.s32.totalorder %s74, %s76
    %p83 = scmp.eq.s32.totalorder %s24, 1
    %p84 = por %p82, %p83
    %p85 = scmp.ne.s32.totalorder %s76, %s77
    %p86 = scmp.eq.s32.totalorder %s24, 0
    %p87 = por %p85, %p86
    %p88 = scmp.ne.s32.totalorder %s76, %s77
    %p89 = scmp.eq.s32.totalorder %s25, 1
    %p90 = por %p88, %p89
    %p92 = scmp.ne.s32.totalorder %s77, %s91
    %p93 = scmp.eq.s32.totalorder %s25, 0
    %p94 = por %p92, %p93
    %s96 = sadd.s32 %s95, 1
    %p99 = scmp.eq.s32.totalorder %s19, 1
    %p100 = scmp.ne.s32.totalorder %s95, %s97
    %p101 = scmp.eq.s32.totalorder %s19, 0
    %p102 = por %p100, %p101
    %p103 = scmp.ne.s32.totalorder %s95, %s97
    %p104 = scmp.eq.s32.totalorder %s24, 1
    %p105 = por %p103, %p104
    %p106 = scmp.ne.s32.totalorder %s97, %s98
    %p107 = scmp.eq.s32.totalorder %s24, 0
    %p108 = por %p106, %p107
    %p109 = scmp.ne.s32.totalorder %s97, %s98
    %p110 = scmp.eq.s32.totalorder %s25, 1
    %p111 = por %p109, %p110
    %p113 = scmp.ne.s32.totalorder %s98, %s112
    %p114 = scmp.eq.s32.totalorder %s25, 0
    %p115 = por %p113, %p114
    %s117 = sadd.s32 %s116, 1
    %p120 = scmp.eq.s32.totalorder %s19, 1
    %p121 = scmp.ne.s32.totalorder %s116, %s118
    %p122 = scmp.eq.s32.totalorder %s19, 0
    %p123 = por %p121, %p122
    %p124 = scmp.ne.s32.totalorder %s116, %s118
    %p125 = scmp.eq.s32.totalorder %s24, 1
    %p126 = por %p124, %p125
    %p127 = scmp.ne.s32.totalorder %s118, %s119
    %p128 = scmp.eq.s32.totalorder %s24, 0
    %p129 = por %p127, %p128
    %p130 = scmp.ne.s32.totalorder %s118, %s119
    %p131 = scmp.eq.s32.totalorder %s25, 1
    %p132 = por %p130, %p131
    %p134 = scmp.ne.s32.totalorder %s119, %s133
    %p135 = scmp.eq.s32.totalorder %s25, 0
    %p136 = por %p134, %p135
    %s138 = sadd.s32 %s137, 1
    %p141 = scmp.eq.s32.totalorder %s19, 1
    %p142 = scmp.ne.s32.totalorder %s137, %s139
    %p143 = scmp.eq.s32.totalorder %s19, 0
    %p144 = por %p142, %p143
    %p145 = scmp.ne.s32.totalorder %s137, %s139
    %p146 = scmp.eq.s32.totalorder %s24, 1
    %p147 = por %p145, %p146
    %p148 = scmp.ne.s32.totalorder %s139, %s140
    %p149 = scmp.eq.s32.totalorder %s24, 0
    %p150 = por %p148, %p149
    %p151 = scmp.ne.s32.totalorder %s139, %s140
    %p152 = scmp.eq.s32.totalorder %s25, 1
    %p153 = por %p151, %p152
    %p155 = scmp.ne.s32.totalorder %s140, %s154
    %p156 = scmp.eq.s32.totalorder %s25, 0
    %p157 = por %p155, %p156
    %s159 = sadd.s32 %s158, 1
    %p162 = scmp.eq.s32.totalorder %s19, 1
    %p163 = scmp.ne.s32.totalorder %s158, %s160
    %p164 = scmp.eq.s32.totalorder %s19, 0
    %p165 = por %p163, %p164
    %p166 = scmp.ne.s32.totalorder %s158, %s160
    %p167 = scmp.eq.s32.totalorder %s24, 1
    %p168 = por %p166, %p167
    %p169 = scmp.ne.s32.totalorder %s160, %s161
    %p170 = scmp.eq.s32.totalorder %s24, 0
    %p171 = por %p169, %p170
    %p172 = scmp.ne.s32.totalorder %s160, %s161
    %p173 = scmp.eq.s32.totalorder %s25, 1
    %p174 = por %p172, %p173
    %p176 = scmp.ne.s32.totalorder %s161, %s175
    %p177 = scmp.eq.s32.totalorder %s25, 0
    %p178 = por %p176, %p177
    %s180 = sadd.s32 %s179, 1
    %p183 = scmp.eq.s32.totalorder %s19, 1
    %p184 = scmp.ne.s32.totalorder %s179, %s181
    %p185 = scmp.eq.s32.totalorder %s19, 0
    %p186 = por %p184, %p185
    %p187 = scmp.ne.s32.totalorder %s179, %s181
    %p188 = scmp.eq.s32.totalorder %s24, 1
    %p189 = por %p187, %p188
    %p190 = scmp.ne.s32.totalorder %s181, %s182
    %p191 = scmp.eq.s32.totalorder %s24, 0
    %p192 = por %p190, %p191
    %p193 = scmp.ne.s32.totalorder %s181, %s182
    %p194 = scmp.eq.s32.totalorder %s25, 1
    %p195 = por %p193, %p194
    %p197 = scmp.ne.s32.totalorder %s182, %s196
    %p198 = scmp.eq.s32.totalorder %s25, 0
    %p199 = por %p197, %p198
    %s201 = sadd.s32 %s200, 1
    %p204 = scmp.eq.s32.totalorder %s19, 1
    %p205 = scmp.ne.s32.totalorder %s200, %s202
    %p206 = scmp.eq.s32.totalorder %s19, 0
    %p207 = por %p205, %p206
    %p208 = scmp.ne.s32.totalorder %s200, %s202
    %p209 = scmp.eq.s32.totalorder %s24, 1
    %p210 = por %p208, %p209
    %p211 = scmp.ne.s32.totalorder %s202, %s203
    %p212 = scmp.eq.s32.totalorder %s24, 0
    %p213 = por %p211, %p212
    %p214 = scmp.ne.s32.totalorder %s202, %s203
    %p215 = scmp.eq.s32.totalorder %s25, 1
    %p216 = por %p214, %p215
    %p218 = scmp.ne.s32.totalorder %s203, %s217
    %p219 = scmp.eq.s32.totalorder %s25, 0
    %p220 = por %p218, %p219
    %s222 = sadd.s32 %s221, 1
    %p225 = scmp.eq.s32.totalorder %s19, 1
    %p226 = scmp.ne.s32.totalorder %s221, %s223
    %p227 = scmp.eq.s32.totalorder %s19, 0
    %p228 = por %p226, %p227
    %p229 = scmp.ne.s32.totalorder %s221, %s223
    %p230 = scmp.eq.s32.totalorder %s24, 1
    %p231 = por %p229, %p230
    %p232 = scmp.ne.s32.totalorder %s223, %s224
    %p233 = scmp.eq.s32.totalorder %s24, 0
    %p234 = por %p232, %p233
    %p235 = scmp.ne.s32.totalorder %s223, %s224
    %p236 = scmp.eq.s32.totalorder %s25, 1
    %p237 = por %p235, %p236
    %p239 = scmp.ne.s32.totalorder %s224, %s238
    %p240 = scmp.eq.s32.totalorder %s25, 0
    %p241 = por %p239, %p240
    %s243 = sadd.s32 %s242, 1
    %p246 = scmp.eq.s32.totalorder %s19, 1
    %p247 = scmp.ne.s32.totalorder %s242, %s244
    %p248 = scmp.eq.s32.totalorder %s19, 0
    %p249 = por %p247, %p248
    %p250 = scmp.ne.s32.totalorder %s242, %s244
    %p251 = scmp.eq.s32.totalorder %s24, 1
    %p252 = por %p250, %p251
    %p253 = scmp.ne.s32.totalorder %s244, %s245
    %p254 = scmp.eq.s32.totalorder %s24, 0
    %p255 = por %p253, %p254
    %p256 = scmp.ne.s32.totalorder %s244, %s245
    %p257 = scmp.eq.s32.totalorder %s25, 1
    %p258 = por %p256, %p257
    %p260 = scmp.ne.s32.totalorder %s245, %s259
    %p261 = scmp.eq.s32.totalorder %s25, 0
    %p262 = por %p260, %p261
    %s264 = sadd.s32 %s263, 1
    %p267 = scmp.eq.s32.totalorder %s19, 1
    %p268 = scmp.ne.s32.totalorder %s263, %s265
    %p269 = scmp.eq.s32.totalorder %s19, 0
    %p270 = por %p268, %p269
    %p271 = scmp.ne.s32.totalorder %s263, %s265
    %p272 = scmp.eq.s32.totalorder %s24, 1
    %p273 = por %p271, %p272
    %p274 = scmp.ne.s32.totalorder %s265, %s266
    %p275 = scmp.eq.s32.totalorder %s24, 0
    %p276 = por %p274, %p275
    %p277 = scmp.ne.s32.totalorder %s265, %s266
    %p278 = scmp.eq.s32.totalorder %s25, 1
    %p279 = por %p277, %p278
    %p281 = scmp.ne.s32.totalorder %s266, %s280
    %p282 = scmp.eq.s32.totalorder %s25, 0
    %p283 = por %p281, %p282
    %s285 = sadd.s32 %s284, 1
    %p288 = scmp.eq.s32.totalorder %s19, 1
    %p289 = scmp.ne.s32.totalorder %s284, %s286
    %p290 = scmp.eq.s32.totalorder %s19, 0
    %p291 = por %p289, %p290
    %p292 = scmp.ne.s32.totalorder %s284, %s286
    %p293 = scmp.eq.s32.totalorder %s24, 1
    %p294 = por %p292, %p293
    %p295 = scmp.ne.s32.totalorder %s286, %s287
    %p296 = scmp.eq.s32.totalorder %s24, 0
    %p297 = por %p295, %p296
    %p298 = scmp.ne.s32.totalorder %s286, %s287
    %p299 = scmp.eq.s32.totalorder %s25, 1
    %p300 = por %p298, %p299
    %p302 = scmp.ne.s32.totalorder %s287, %s301
    %p303 = scmp.eq.s32.totalorder %s25, 0
    %p304 = por %p302, %p303
    %s305 = ssub.s32 %s19, %s26
    %p306 = scmp.eq.s32.totalorder %s305, 0
    %s308 = sadd.s32 %s307, 1
    %s309 = scalar_select %p306, %s307, %s308
    %p312 = pneg %p306
    %p313 = scmp.eq.s32.totalorder %s19, 1
    %p314 = por %p312, %p313
    %p315 = scmp.ne.s32.totalorder %s307, %s310
    %p316 = scmp.eq.s32.totalorder %s19, 0
    %p317 = por %p315, %p316
    %p318 = scmp.ne.s32.totalorder %s307, %s310
    %p319 = scmp.eq.s32.totalorder %s24, 1
    %p320 = por %p318, %p319
    %p321 = scmp.ne.s32.totalorder %s310, %s311
    %p322 = scmp.eq.s32.totalorder %s24, 0
    %p323 = por %p321, %p322
    %p324 = scmp.ne.s32.totalorder %s310, %s311
    %p325 = scmp.eq.s32.totalorder %s25, 1
    %p326 = por %p324, %p325
    %p328 = scmp.ne.s32.totalorder %s311, %s327
    %p329 = scmp.eq.s32.totalorder %s25, 0
    %p330 = por %p328, %p329
    %p331 = scmp.le.s32.totalorder 1, %s19
    %p332 = scmp.lt.s32.totalorder %s19, 3
    %p333 = pnand %p331, %p332
    %p334 = pneg %p333
    // Predicated region
    $region9: #{tpu_custom_call.1} parent=5 // pred_check
      _
    $region10: #{tpu_custom_call.1} parent=5 // pred_check_branch
      %336 = sbr.rel (%p333) target = $region12
    $region11: #{tpu_custom_call.1} parent=5 // pred_region
      %s337 = ssub.s32 %s19, 1
      // Predicated region
      $region13: #{tpu_custom_call.1} parent=11 // pred_check
        %p338 = pneg %p66
      $region14: #{tpu_custom_call.1} parent=11 // pred_check_branch
        %340 = sbr.rel (%p338) target = $region16
      $region15: #{tpu_custom_call.1} parent=11 // pred_region
        _
      $region16: #{tpu_custom_call.1} parent=11 // pred_fallthru
        _
      // Predicated region
      $region17: #{tpu_custom_call.1} parent=11 // pred_check
        %p341 = pneg %p87
      $region18: #{tpu_custom_call.1} parent=11 // pred_check_branch
        %343 = sbr.rel (%p341) target = $region20
      $region19: #{tpu_custom_call.1} parent=11 // pred_region
        _
      $region20: #{tpu_custom_call.1} parent=11 // pred_fallthru
        _
      // Predicated region
      $region21: #{tpu_custom_call.1} parent=11 // pred_check
        %p344 = pneg %p108
      $region22: #{tpu_custom_call.1} parent=11 // pred_check_branch
        %346 = sbr.rel (%p344) target = $region24
      $region23: #{tpu_custom_call.1} parent=11 // pred_region
        _
      $region24: #{tpu_custom_call.1} parent=11 // pred_fallthru
        _
      // Predicated region
      $region25: #{tpu_custom_call.1} parent=11 // pred_check
        %p347 = pneg %p129
      $region26: #{tpu_custom_call.1} parent=11 // pred_check_branch
        %349 = sbr.rel (%p347) target = $region28
      $region27: #{tpu_custom_call.1} parent=11 // pred_region
        _
      $region28: #{tpu_custom_call.1} parent=11 // pred_fallthru
        _
      // Predicated region
      $region29: #{tpu_custom_call.1} parent=11 // pred_check
        %p350 = pneg %p150
      $region30: #{tpu_custom_call.1} parent=11 // pred_check_branch
        %352 = sbr.rel (%p350) target = $region32
      $region31: #{tpu_custom_call.1} parent=11 // pred_region
        _
      $region32: #{tpu_custom_call.1} parent=11 // pred_fallthru
        _
      // Predicated region
      $region33: #{tpu_custom_call.1} parent=11 // pred_check
        %p353 = pneg %p171
      $region34: #{tpu_custom_call.1} parent=11 // pred_check_branch
        %355 = sbr.rel (%p353) target = $region36
      $region35: #{tpu_custom_call.1} parent=11 // pred_region
        _
      $region36: #{tpu_custom_call.1} parent=11 // pred_fallthru
        _
      // Predicated region
      $region37: #{tpu_custom_call.1} parent=11 // pred_check
        %p356 = pneg %p192
      $region38: #{tpu_custom_call.1} parent=11 // pred_check_branch
        %358 = sbr.rel (%p356) target = $region40
      $region39: #{tpu_custom_call.1} parent=11 // pred_region
        _
      $region40: #{tpu_custom_call.1} parent=11 // pred_fallthru
        _
      // Predicated region
      $region41: #{tpu_custom_call.1} parent=11 // pred_check
        %p359 = pneg %p213
      $region42: #{tpu_custom_call.1} parent=11 // pred_check_branch
        %361 = sbr.rel (%p359) target = $region44
      $region43: #{tpu_custom_call.1} parent=11 // pred_region
        _
      $region44: #{tpu_custom_call.1} parent=11 // pred_fallthru
        _
      // Predicated region
      $region45: #{tpu_custom_call.1} parent=11 // pred_check
        %p362 = pneg %p234
      $region46: #{tpu_custom_call.1} parent=11 // pred_check_branch
        %364 = sbr.rel (%p362) target = $region48
      $region47: #{tpu_custom_call.1} parent=11 // pred_region
        _
      $region48: #{tpu_custom_call.1} parent=11 // pred_fallthru
        _
      // Predicated region
      $region49: #{tpu_custom_call.1} parent=11 // pred_check
        %p365 = pneg %p255
      $region50: #{tpu_custom_call.1} parent=11 // pred_check_branch
        %367 = sbr.rel (%p365) target = $region52
      $region51: #{tpu_custom_call.1} parent=11 // pred_region
        _
      $region52: #{tpu_custom_call.1} parent=11 // pred_fallthru
        _
      // Predicated region
      $region53: #{tpu_custom_call.1} parent=11 // pred_check
        %p368 = pneg %p276
      $region54: #{tpu_custom_call.1} parent=11 // pred_check_branch
        %370 = sbr.rel (%p368) target = $region56
      $region55: #{tpu_custom_call.1} parent=11 // pred_region
        _
      $region56: #{tpu_custom_call.1} parent=11 // pred_fallthru
        _
      // Predicated region
      $region57: #{tpu_custom_call.1} parent=11 // pred_check
        %p371 = pneg %p297
      $region58: #{tpu_custom_call.1} parent=11 // pred_check_branch
        %373 = sbr.rel (%p371) target = $region60
      $region59: #{tpu_custom_call.1} parent=11 // pred_region
        _
      $region60: #{tpu_custom_call.1} parent=11 // pred_fallthru
        _
    $region12: #{tpu_custom_call.1} parent=5 // pred_fallthru
      _
    %p374 = scmp.lt.s32.totalorder %s19, 2
    // Predicated region
    $region61: #{tpu_custom_call.1} parent=5 // pred_check
      %p375 = pneg %p374
    $region62: #{tpu_custom_call.1} parent=5 // pred_check_branch
      %377 = sbr.rel (%p375) target = $region64
    $region63: #{tpu_custom_call.1} parent=5 // pred_region
      // Predicated region
      $region65: #{tpu_custom_call.1} parent=63 // pred_check
        %p378 = pneg %p39
      $region66: #{tpu_custom_call.1} parent=63 // pred_check_branch
        %380 = sbr.rel (%p378) target = $region68
      $region67: #{tpu_custom_call.1} parent=63 // pred_region
        %s381 = smul.u32 13, %s19
        %p382 = scmp.lt.s32.totalorder %s381, 25
        %s383 = scalar_select %p382, %s381, 25
        %s384 = smul.addr %s383, 4
        %s385 = scalar_lea.vmem %s0, %s384
        %s386 = smul.u32 13, %s19
      $region68: #{tpu_custom_call.1} parent=63 // pred_fallthru
        _
    $region64: #{tpu_custom_call.1} parent=5 // pred_fallthru
      _
    %p387 = scmp.le.s32.totalorder 1, %s19
    %p388 = scmp.lt.s32.totalorder %s19, 3
    %p389 = pnand %p387, %p388
    %p390 = pneg %p389
    // Predicated region
    $region69: #{tpu_custom_call.1} parent=5 // pred_check
      _
    $region70: #{tpu_custom_call.1} parent=5 // pred_check_branch
      %392 = sbr.rel (%p389) target = $region72
    $region71: #{tpu_custom_call.1} parent=5 // pred_region
      %s393 = ssub.s32 %s19, 1
      %s394 = smul.u32 13, %s24
      %p395 = scmp.lt.s32.totalorder %s394, 25
      %s396 = scalar_select %p395, %s394, 25
      %s397 = smul.addr %s396, 4
      %s398 = scalar_lea.vmem %s0, %s397
      %p399 = pneg %p45
      %p400 = pneg %p42
      %p401 = pneg %p66
      %p402 = pneg %p63
      %p403 = pneg %p87
      %p404 = pneg %p84
      %p405 = pneg %p108
      %p406 = pneg %p105
      %p407 = pneg %p129
      %p408 = pneg %p126
      %p409 = pneg %p150
      %p410 = pneg %p147
      %p411 = pneg %p171
      %p412 = pneg %p168
      %p413 = pneg %p192
      %p414 = pneg %p189
      %p415 = pneg %p213
      %p416 = pneg %p210
      %p417 = pneg %p234
      %p418 = pneg %p231
      %p419 = pneg %p255
      %p420 = pneg %p252
      %p421 = pneg %p276
      %p422 = pneg %p273
      %p423 = pneg %p297
      %p424 = pneg %p294
      %p425 = pneg %p323
      %p426 = pneg %p320
      %s427 = smul.u32 13, %s24
      %p428 = scmp.lt.s32.totalorder %s427, 25
      %s429 = scalar_select %p428, %s427, 25
      %s430 = smul.addr %s429, 8
      %s431 = scalar_lea.vmem %s13, %s430
      %s432 = smul.u32 13, %s24
      %p433 = scmp.lt.s32.totalorder %s432, 25
      %s434 = scalar_select %p433, %s432, 25
      %s435 = smul.addr %s434, 4
      %s436 = scalar_lea.vmem %s0, %s435
      %s437 = smul.u32 13, %s24
      %s438 = smul.u32 13, %s24
      %p439 = scmp.lt.s32.totalorder %s438, 25
      %s440 = scalar_select %p439, %s438, 25
      %s441 = smul.addr %s440, 8
      %s442 = scalar_lea.vmem %s13, %s441
      %s443 = smul.u32 13, %s24
      %v445 = vld [vmem:[%s436] sm:$0xf]
      %v446 = vld [vmem:[%s436 + $0x4] sm:$0xf]
      %v447 = vld [vmem:[%s436 + $0x8] sm:$0xf]
      %v448 = vld [vmem:[%s436 + $0xc] sm:$0xf]
      %v449 = vld [vmem:[%s436 + $0x10] sm:$0xf]
      %v450 = vld [vmem:[%s436 + $0x14] sm:$0xf]
      %v451 = vld [vmem:[%s436 + $0x18] sm:$0xf]
      %v452 = vld [vmem:[%s436 + $0x1c] sm:$0xf]
      %v453 = vld [vmem:[%s436 + $0x20] sm:$0xf]
      %v454 = vld [vmem:[%s436 + $0x24] sm:$0xf]
      %v455 = vld [vmem:[%s436 + $0x28] sm:$0xf]
      %v456 = vld [vmem:[%s436 + $0x2c] sm:$0xf]
      %v457 = vld [vmem:[%s436 + $0x30] sm:$0xf]
      %v458 = vld [vmem:[%s1] sm:$0xf]
      %v459 = vld [vmem:[%s2] sm:$0x3]
      %v461 = vperm.slane %v459, 0
      %v462 = vperm.slane %v459, 1
      %v478 = vunpack.c.l.b16 %v445
      %v479 = vunpack.c.l.b16 %v446
      %v480 = vunpack.c.l.b16 %v447
      %v481 = vunpack.c.l.b16 %v448
      %v482 = vunpack.c.l.b16 %v449
      %v483 = vunpack.c.l.b16 %v450
      %v484 = vunpack.c.l.b16 %v451
      %v485 = vunpack.c.l.b16 %v452
      %v486 = vunpack.c.l.b16 %v453
      %v487 = vunpack.c.l.b16 %v454
      %v488 = vunpack.c.l.b16 %v455
      %v489 = vunpack.c.l.b16 %v456
      %v490 = vunpack.c.l.b16 %v457
      %v491 = vpack.c.b16 %v479, %v478
      %v492 = vpack.c.b16 %v481, %v480
      %v493 = vpack.c.b16 %v483, %v482
      %v494 = vpack.c.b16 %v485, %v484
      %v495 = vpack.c.b16 %v487, %v486
      %v496 = vpack.c.b16 %v489, %v488
      %v497 = vpack.c.b16 %v490, %v490
      %499 = vst [vmem:[#allocation1] ss:$4 sm:$0xff] %v458
      %v500 = vld.sshfl [vmem:[#allocation1] sm:$0xff pattern:$0x73625140]
      %v501 = vld.sshfl [vmem:[#allocation1 + $0x8] sm:$0xff pattern:$0x73625140]
      %vm502 = vcmask 31744
      %v504 = vsel %vm502, %v491, 0
      %v507 = vsel %vm502, %v492, 0
      %v510 = vsel %vm502, %v493, 0
      %v513 = vsel %vm502, %v494, 0
      %v516 = vsel %vm502, %v495, 0
      %v519 = vsel %vm502, %v496, 0
      %v522 = vsel %vm502, %v497, 0
      %vm524 = vcmask 1041408
      %v525 = vsel %vm524, %v500, 0
      %v527 = vsel %vm524, %v501, 0
      %529 = vmatpush.bf16.msra.mxu0 0
      %530 = vmatpush.bf16.msra.mxu0 0
      %531 = vmatpush.bf16.msra.mxu0 0
      %532 = vmatpush.bf16.msra.mxu0 0
      %533 = vmatpush.bf16.msra.mxu0 0
      %534 = vmatpush.bf16.msra.mxu0 0
      %535 = vmatpush.bf16.msra.mxu0 0
      %536 = vmatpush.bf16.msra.mxu0 %v525
      %537 = vmatmul.bf16.gmra.mxu0 %v504
      %v538 = vpop.f32.mrf.mxu0
      %v539 = vadd.f32 %v461, %v538
      %v540 = vpop.f32.mrf.mxu0
      %v541 = vadd.f32 %v461, %v540
      %542 = vmatmul.bf16.gmra.mxu0 %v507
      %v543 = vpop.f32.mrf.mxu0
      %v544 = vadd.f32 %v461, %v543
      %v545 = vpop.f32.mrf.mxu0
      %v546 = vadd.f32 %v461, %v545
      %547 = vmatmul.bf16.gmra.mxu0 %v510
      %v548 = vpop.f32.mrf.mxu0
      %v549 = vadd.f32 %v461, %v548
      %v550 = vpop.f32.mrf.mxu0
      %v551 = vadd.f32 %v461, %v550
      %552 = vmatmul.bf16.gmra.mxu0 %v513
      %v553 = vpop.f32.mrf.mxu0
      %v554 = vadd.f32 %v461, %v553
      %v555 = vpop.f32.mrf.mxu0
      %v556 = vadd.f32 %v461, %v555
      %557 = vmatmul.bf16.gmra.mxu0 %v516
      %v558 = vpop.f32.mrf.mxu0
      %v559 = vadd.f32 %v461, %v558
      %v560 = vpop.f32.mrf.mxu0
      %v561 = vadd.f32 %v461, %v560
      %562 = vmatmul.bf16.gmra.mxu0 %v519
      %v563 = vpop.f32.mrf.mxu0
      %v564 = vadd.f32 %v461, %v563
      %v565 = vpop.f32.mrf.mxu0
      %v566 = vadd.f32 %v461, %v565
      %567 = vmatmul.bf16.gmra.mxu0 %v522
      %v568 = vpop.f32.mrf.mxu0
      %v569 = vadd.f32 %v461, %v568
      %v570 = vpop.f32.mrf.mxu0
      %571 = vdwg.mxu0
      %572 = vmatpush.bf16.msra.mxu0 0
      %573 = vmatpush.bf16.msra.mxu0 0
      %574 = vmatpush.bf16.msra.mxu0 0
      %575 = vmatpush.bf16.msra.mxu0 0
      %576 = vmatpush.bf16.msra.mxu0 0
      %577 = vmatpush.bf16.msra.mxu0 0
      %578 = vmatpush.bf16.msra.mxu0 0
      %579 = vmatpush.bf16.msra.mxu0 %v527
      %580 = vmatmul.bf16.gmra.mxu0 %v504
      %v581 = vpop.f32.mrf.mxu0
      %v582 = vadd.f32 %v462, %v581
      %v583 = vpop.f32.mrf.mxu0
      %v584 = vadd.f32 %v462, %v583
      %585 = vmatmul.bf16.gmra.mxu0 %v507
      %v586 = vpop.f32.mrf.mxu0
      %v587 = vadd.f32 %v462, %v586
      %v588 = vpop.f32.mrf.mxu0
      %v589 = vadd.f32 %v462, %v588
      %590 = vmatmul.bf16.gmra.mxu0 %v510
      %v591 = vpop.f32.mrf.mxu0
      %v592 = vadd.f32 %v462, %v591
      %v593 = vpop.f32.mrf.mxu0
      %v594 = vadd.f32 %v462, %v593
      %595 = vmatmul.bf16.gmra.mxu0 %v513
      %v596 = vpop.f32.mrf.mxu0
      %v597 = vadd.f32 %v462, %v596
      %v598 = vpop.f32.mrf.mxu0
      %v599 = vadd.f32 %v462, %v598
      %600 = vmatmul.bf16.gmra.mxu0 %v516
      %v601 = vpop.f32.mrf.mxu0
      %v602 = vadd.f32 %v462, %v601
      %v603 = vpop.f32.mrf.mxu0
      %v604 = vadd.f32 %v462, %v603
      %605 = vmatmul.bf16.gmra.mxu0 %v519
      %v606 = vpop.f32.mrf.mxu0
      %v607 = vadd.f32 %v462, %v606
      %v608 = vpop.f32.mrf.mxu0
      %v609 = vadd.f32 %v462, %v608
      %610 = vmatmul.bf16.gmra.mxu0 %v522
      %v611 = vpop.f32.mrf.mxu0
      %v612 = vadd.f32 %v462, %v611
      %v613 = vpop.f32.mrf.mxu0
      %614 = vdwg.mxu0
      %v615 = vmax.f32 %v539, 0.0
      %v616 = vmax.f32 %v582, 0.0
      %v617 = vmax.f32 %v541, 0.0
      %v618 = vmax.f32 %v584, 0.0
      %v619 = vmax.f32 %v544, 0.0
      %v620 = vmax.f32 %v587, 0.0
      %v621 = vmax.f32 %v546, 0.0
      %v622 = vmax.f32 %v589, 0.0
      %v623 = vmax.f32 %v549, 0.0
      %v624 = vmax.f32 %v592, 0.0
      %v625 = vmax.f32 %v551, 0.0
      %v626 = vmax.f32 %v594, 0.0
      %v627 = vmax.f32 %v554, 0.0
      %v628 = vmax.f32 %v597, 0.0
      %v629 = vmax.f32 %v556, 0.0
      %v630 = vmax.f32 %v599, 0.0
      %v631 = vmax.f32 %v559, 0.0
      %v632 = vmax.f32 %v602, 0.0
      %v633 = vmax.f32 %v561, 0.0
      %v634 = vmax.f32 %v604, 0.0
      %v635 = vmax.f32 %v564, 0.0
      %v636 = vmax.f32 %v607, 0.0
      %v637 = vmax.f32 %v566, 0.0
      %v638 = vmax.f32 %v609, 0.0
      %v639 = vmax.f32 %v569, 0.0
      %v640 = vmax.f32 %v612, 0.0
      %v641 = vpack.c.bf16 %v617, %v615
      %v642 = vpack.c.bf16 %v618, %v616
      %v643 = vpack.c.bf16 %v621, %v619
      %v644 = vpack.c.bf16 %v622, %v620
      %v645 = vpack.c.bf16 %v625, %v623
      %v646 = vpack.c.bf16 %v626, %v624
      %v647 = vpack.c.bf16 %v629, %v627
      %v648 = vpack.c.bf16 %v630, %v628
      %v649 = vpack.c.bf16 %v633, %v631
      %v650 = vpack.c.bf16 %v634, %v632
      %v651 = vpack.c.bf16 %v637, %v635
      %v652 = vpack.c.bf16 %v638, %v636
      %v653 = vpack.c.bf16 %v639, %v639
      %v654 = vpack.c.bf16 %v640, %v640
      %v655 = vld [vmem:[%s3] sm:$0xf]
      %v656 = vld [vmem:[%s3 + $0x4] sm:$0xf]
      %v657 = vld [vmem:[%s3 + $0x8] sm:$0xf]
      %v658 = vld [vmem:[%s3 + $0xc] sm:$0xf]
      %v659 = vld [vmem:[%s3 + $0x10] sm:$0xf]
      %v660 = vld [vmem:[%s3 + $0x14] sm:$0xf]
      %v661 = vld [vmem:[%s3 + $0x18] sm:$0xf]
      %v662 = vld [vmem:[%s3 + $0x1c] sm:$0xf]
      %v663 = vld [vmem:[%s3 + $0x20] sm:$0xf]
      %v664 = vld [vmem:[%s3 + $0x24] sm:$0xf]
      %v665 = vld [vmem:[%s3 + $0x28] sm:$0xf]
      %v666 = vld [vmem:[%s3 + $0x2c] sm:$0xf]
      %v667 = vld [vmem:[%s3 + $0x30] sm:$0xf]
      %v668 = vld [vmem:[%s3 + $0x34] sm:$0xf]
      %v669 = vld [vmem:[%s3 + $0x38] sm:$0xf]
      %v670 = vld [vmem:[%s3 + $0x3c] sm:$0xf]
      %v671 = vld [vmem:[%s3 + $0x40] sm:$0xf]
      %v672 = vld [vmem:[%s3 + $0x44] sm:$0xf]
      %v673 = vld [vmem:[%s3 + $0x48] sm:$0xf]
      %v674 = vld [vmem:[%s3 + $0x4c] sm:$0xf]
      %v675 = vld [vmem:[%s3 + $0x50] sm:$0xf]
      %v676 = vld [vmem:[%s3 + $0x54] sm:$0xf]
      %v677 = vld [vmem:[%s3 + $0x58] sm:$0xf]
      %v678 = vld [vmem:[%s3 + $0x5c] sm:$0xf]
      %v679 = vld [vmem:[%s3 + $0x60] sm:$0xf]
      %v680 = vld [vmem:[%s3 + $0x64] sm:$0xf]
      %v681 = vld [vmem:[%s3 + $0x68] sm:$0xf]
      %v682 = vld [vmem:[%s3 + $0x6c] sm:$0xf]
      %v683 = vld [vmem:[%s3 + $0x70] sm:$0xf]
      %v684 = vld [vmem:[%s3 + $0x74] sm:$0xf]
      %v685 = vld [vmem:[%s3 + $0x78] sm:$0xf]
      %v686 = vld [vmem:[%s3 + $0x7c] sm:$0xf]
      %v687 = vld [vmem:[%s4] sm:$0x1]
      %v689 = vperm.slane %v687, 0
      %v723 = vunpack.c.l.b16 %v655
      %v724 = vunpack.c.l.b16 %v656
      %v725 = vunpack.c.l.b16 %v657
      %v726 = vunpack.c.l.b16 %v658
      %v727 = vunpack.c.l.b16 %v659
      %v728 = vunpack.c.l.b16 %v660
      %v729 = vunpack.c.l.b16 %v661
      %v730 = vunpack.c.l.b16 %v662
      %v731 = vunpack.c.l.b16 %v663
      %v732 = vunpack.c.l.b16 %v664
      %v733 = vunpack.c.l.b16 %v665
      %v734 = vunpack.c.l.b16 %v666
      %v735 = vunpack.c.l.b16 %v667
      %v736 = vunpack.c.l.b16 %v668
      %v737 = vunpack.c.l.b16 %v669
      %v738 = vunpack.c.l.b16 %v670
      %v739 = vunpack.c.l.b16 %v671
      %v740 = vunpack.c.l.b16 %v672
      %v741 = vunpack.c.l.b16 %v673
      %v742 = vunpack.c.l.b16 %v674
      %v743 = vunpack.c.l.b16 %v675
      %v744 = vunpack.c.l.b16 %v676
      %v745 = vunpack.c.l.b16 %v677
      %v746 = vunpack.c.l.b16 %v678
      %v747 = vunpack.c.l.b16 %v679
      %v748 = vunpack.c.l.b16 %v680
      %v749 = vunpack.c.l.b16 %v681
      %v750 = vunpack.c.l.b16 %v682
      %v751 = vunpack.c.l.b16 %v683
      %v752 = vunpack.c.l.b16 %v684
      %v753 = vunpack.c.l.b16 %v685
      %v754 = vunpack.c.l.b16 %v686
      %v755 = vpack.c.b16 %v724, %v723
      %v756 = vpack.c.b16 %v726, %v725
      %v757 = vpack.c.b16 %v728, %v727
      %v758 = vpack.c.b16 %v730, %v729
      %v759 = vpack.c.b16 %v732, %v731
      %v760 = vpack.c.b16 %v734, %v733
      %v761 = vpack.c.b16 %v736, %v735
      %v762 = vpack.c.b16 %v738, %v737
      %v763 = vpack.c.b16 %v740, %v739
      %v764 = vpack.c.b16 %v742, %v741
      %v765 = vpack.c.b16 %v744, %v743
      %v766 = vpack.c.b16 %v746, %v745
      %v767 = vpack.c.b16 %v748, %v747
      %v768 = vpack.c.b16 %v750, %v749
      %v769 = vpack.c.b16 %v752, %v751
      %v770 = vpack.c.b16 %v754, %v753
      %787 = vmatpush.bf16.msra.mxu0 %v762
      %788 = vmatpush.bf16.msra.mxu0 %v761
      %789 = vmatpush.bf16.msra.mxu0 %v760
      %790 = vmatpush.bf16.msra.mxu0 %v759
      %791 = vmatpush.bf16.msra.mxu0 %v758
      %792 = vmatpush.bf16.msra.mxu0 %v757
      %793 = vmatpush.bf16.msra.mxu0 %v756
      %794 = vmatpush.bf16.msra.mxu0 %v755
      %795 = vmatmul.bf16.gmra.mxu0 %v641
      %v796 = vpop.f32.mrf.mxu0
      %v797 = vadd.f32 %v689, %v796
      %v798 = vpop.f32.mrf.mxu0
      %v799 = vadd.f32 %v689, %v798
      %800 = vmatmul.bf16.gmra.mxu0 %v643
      %v801 = vpop.f32.mrf.mxu0
      %v802 = vadd.f32 %v689, %v801
      %v803 = vpop.f32.mrf.mxu0
      %v804 = vadd.f32 %v689, %v803
      %805 = vmatmul.bf16.gmra.mxu0 %v645
      %v806 = vpop.f32.mrf.mxu0
      %v807 = vadd.f32 %v689, %v806
      %v808 = vpop.f32.mrf.mxu0
      %v809 = vadd.f32 %v689, %v808
      %810 = vmatmul.bf16.gmra.mxu0 %v647
      %v811 = vpop.f32.mrf.mxu0
      %v812 = vadd.f32 %v689, %v811
      %v813 = vpop.f32.mrf.mxu0
      %v814 = vadd.f32 %v689, %v813
      %815 = vmatmul.bf16.gmra.mxu0 %v649
      %v816 = vpop.f32.mrf.mxu0
      %v817 = vadd.f32 %v689, %v816
      %v818 = vpop.f32.mrf.mxu0
      %v819 = vadd.f32 %v689, %v818
      %820 = vmatmul.bf16.gmra.mxu0 %v651
      %v821 = vpop.f32.mrf.mxu0
      %v822 = vadd.f32 %v689, %v821
      %v823 = vpop.f32.mrf.mxu0
      %v824 = vadd.f32 %v689, %v823
      %825 = vmatmul.bf16.gmra.mxu0 %v653
      %v826 = vpop.f32.mrf.mxu0
      %v827 = vadd.f32 %v689, %v826
      %v828 = vpop.f32.mrf.mxu0
      %829 = vdwg.mxu0
      %830 = vmatpush.bf16.msra.mxu0 %v770
      %831 = vmatpush.bf16.msra.mxu0 %v769
      %832 = vmatpush.bf16.msra.mxu0 %v768
      %833 = vmatpush.bf16.msra.mxu0 %v767
      %834 = vmatpush.bf16.msra.mxu0 %v766
      %835 = vmatpush.bf16.msra.mxu0 %v765
      %836 = vmatpush.bf16.msra.mxu0 %v764
      %837 = vmatpush.bf16.msra.mxu0 %v763
      %838 = vmatmul.bf16.gmra.mxu0 %v642
      %v839 = vpop.f32.mrf.mxu0
      %v840 = vadd.f32 %v797, %v839
      %v841 = vpop.f32.mrf.mxu0
      %v842 = vadd.f32 %v799, %v841
      %843 = vmatmul.bf16.gmra.mxu0 %v644
      %v844 = vpop.f32.mrf.mxu0
      %v845 = vadd.f32 %v802, %v844
      %v846 = vpop.f32.mrf.mxu0
      %v847 = vadd.f32 %v804, %v846
      %848 = vmatmul.bf16.gmra.mxu0 %v646
      %v849 = vpop.f32.mrf.mxu0
      %v850 = vadd.f32 %v807, %v849
      %v851 = vpop.f32.mrf.mxu0
      %v852 = vadd.f32 %v809, %v851
      %853 = vmatmul.bf16.gmra.mxu0 %v648
      %v854 = vpop.f32.mrf.mxu0
      %v855 = vadd.f32 %v812, %v854
      %v856 = vpop.f32.mrf.mxu0
      %v857 = vadd.f32 %v814, %v856
      %858 = vmatmul.bf16.gmra.mxu0 %v650
      %v859 = vpop.f32.mrf.mxu0
      %v860 = vadd.f32 %v817, %v859
      %v861 = vpop.f32.mrf.mxu0
      %v862 = vadd.f32 %v819, %v861
      %863 = vmatmul.bf16.gmra.mxu0 %v652
      %v864 = vpop.f32.mrf.mxu0
      %v865 = vadd.f32 %v822, %v864
      %v866 = vpop.f32.mrf.mxu0
      %v867 = vadd.f32 %v824, %v866
      %868 = vmatmul.bf16.gmra.mxu0 %v654
      %v869 = vpop.f32.mrf.mxu0
      %v870 = vadd.f32 %v827, %v869
      %v871 = vpop.f32.mrf.mxu0
      %872 = vdwg.mxu0
      %v873 = vmax.f32 %v840, 0.0
      %v874 = vmax.f32 %v842, 0.0
      %v875 = vmax.f32 %v845, 0.0
      %v876 = vmax.f32 %v847, 0.0
      %v877 = vmax.f32 %v850, 0.0
      %v878 = vmax.f32 %v852, 0.0
      %v879 = vmax.f32 %v855, 0.0
      %v880 = vmax.f32 %v857, 0.0
      %v881 = vmax.f32 %v860, 0.0
      %v882 = vmax.f32 %v862, 0.0
      %v883 = vmax.f32 %v865, 0.0
      %v884 = vmax.f32 %v867, 0.0
      %v885 = vmax.f32 %v870, 0.0
      %v886 = vpack.c.bf16 %v874, %v873
      %v887 = vpack.c.bf16 %v876, %v875
      %v888 = vpack.c.bf16 %v878, %v877
      %v889 = vpack.c.bf16 %v880, %v879
      %v890 = vpack.c.bf16 %v882, %v881
      %v891 = vpack.c.bf16 %v884, %v883
      %v892 = vpack.c.bf16 %v885, %v885
      %v893 = vld [vmem:[%s5] sm:$0xf]
      %v894 = vld [vmem:[%s5 + $0x4] sm:$0xf]
      %v895 = vld [vmem:[%s5 + $0x8] sm:$0xf]
      %v896 = vld [vmem:[%s5 + $0xc] sm:$0xf]
      %v897 = vld [vmem:[%s5 + $0x10] sm:$0xf]
      %v898 = vld [vmem:[%s5 + $0x14] sm:$0xf]
      %v899 = vld [vmem:[%s5 + $0x18] sm:$0xf]
      %v900 = vld [vmem:[%s5 + $0x1c] sm:$0xf]
      %v901 = vld [vmem:[%s5 + $0x20] sm:$0xf]
      %v902 = vld [vmem:[%s5 + $0x24] sm:$0xf]
      %v903 = vld [vmem:[%s5 + $0x28] sm:$0xf]
      %v904 = vld [vmem:[%s5 + $0x2c] sm:$0xf]
      %v905 = vld [vmem:[%s5 + $0x30] sm:$0xf]
      %v906 = vld [vmem:[%s5 + $0x34] sm:$0xf]
      %v907 = vld [vmem:[%s5 + $0x38] sm:$0xf]
      %v908 = vld [vmem:[%s5 + $0x3c] sm:$0xf]
      %v909 = vld [vmem:[%s6] sm:$0x1]
      %v911 = vperm.slane %v909, 0
      %v929 = vunpack.c.l.b16 %v893
      %v930 = vunpack.c.l.b16 %v894
      %v931 = vunpack.c.l.b16 %v895
      %v932 = vunpack.c.l.b16 %v896
      %v933 = vunpack.c.l.b16 %v897
      %v934 = vunpack.c.l.b16 %v898
      %v935 = vunpack.c.l.b16 %v899
      %v936 = vunpack.c.l.b16 %v900
      %v937 = vunpack.c.l.b16 %v901
      %v938 = vunpack.c.l.b16 %v902
      %v939 = vunpack.c.l.b16 %v903
      %v940 = vunpack.c.l.b16 %v904
      %v941 = vunpack.c.l.b16 %v905
      %v942 = vunpack.c.l.b16 %v906
      %v943 = vunpack.c.l.b16 %v907
      %v944 = vunpack.c.l.b16 %v908
      %v945 = vpack.c.b16 %v930, %v929
      %v946 = vpack.c.b16 %v932, %v931
      %v947 = vpack.c.b16 %v934, %v933
      %v948 = vpack.c.b16 %v936, %v935
      %v949 = vpack.c.b16 %v938, %v937
      %v950 = vpack.c.b16 %v940, %v939
      %v951 = vpack.c.b16 %v942, %v941
      %v952 = vpack.c.b16 %v944, %v943
      %961 = vmatpush.bf16.msra.mxu0 %v952
      %962 = vmatpush.bf16.msra.mxu0 %v951
      %963 = vmatpush.bf16.msra.mxu0 %v950
      %964 = vmatpush.bf16.msra.mxu0 %v949
      %965 = vmatpush.bf16.msra.mxu0 %v948
      %966 = vmatpush.bf16.msra.mxu0 %v947
      %967 = vmatpush.bf16.msra.mxu0 %v946
      %968 = vmatpush.bf16.msra.mxu0 %v945
      %969 = vmatmul.bf16.gmra.mxu0 %v886
      %v970 = vpop.f32.mrf.mxu0
      %v971 = vadd.f32 %v911, %v970
      %v972 = vpop.f32.mrf.mxu0
      %v973 = vadd.f32 %v911, %v972
      %974 = vmatmul.bf16.gmra.mxu0 %v887
      %v975 = vpop.f32.mrf.mxu0
      %v976 = vadd.f32 %v911, %v975
      %v977 = vpop.f32.mrf.mxu0
      %v978 = vadd.f32 %v911, %v977
      %979 = vmatmul.bf16.gmra.mxu0 %v888
      %v980 = vpop.f32.mrf.mxu0
      %v981 = vadd.f32 %v911, %v980
      %v982 = vpop.f32.mrf.mxu0
      %v983 = vadd.f32 %v911, %v982
      %984 = vmatmul.bf16.gmra.mxu0 %v889
      %v985 = vpop.f32.mrf.mxu0
      %v986 = vadd.f32 %v911, %v985
      %v987 = vpop.f32.mrf.mxu0
      %v988 = vadd.f32 %v911, %v987
      %989 = vmatmul.bf16.gmra.mxu0 %v890
      %v990 = vpop.f32.mrf.mxu0
      %v991 = vadd.f32 %v911, %v990
      %v992 = vpop.f32.mrf.mxu0
      %v993 = vadd.f32 %v911, %v992
      %994 = vmatmul.bf16.gmra.mxu0 %v891
      %v995 = vpop.f32.mrf.mxu0
      %v996 = vadd.f32 %v911, %v995
      %v997 = vpop.f32.mrf.mxu0
      %v998 = vadd.f32 %v911, %v997
      %999 = vmatmul.bf16.gmra.mxu0 %v892
      %v1000 = vpop.f32.mrf.mxu0
      %v1001 = vadd.f32 %v911, %v1000
      %v1002 = vpop.f32.mrf.mxu0
      %1003 = vdwg.mxu0
      %v1004 = vmax.f32 %v971, 0.0
      %v1005 = vmax.f32 %v973, 0.0
      %v1006 = vmax.f32 %v976, 0.0
      %v1007 = vmax.f32 %v978, 0.0
      %v1008 = vmax.f32 %v981, 0.0
      %v1009 = vmax.f32 %v983, 0.0
      %v1010 = vmax.f32 %v986, 0.0
      %v1011 = vmax.f32 %v988, 0.0
      %v1012 = vmax.f32 %v991, 0.0
      %v1013 = vmax.f32 %v993, 0.0
      %v1014 = vmax.f32 %v996, 0.0
      %v1015 = vmax.f32 %v998, 0.0
      %v1016 = vmax.f32 %v1001, 0.0
      %v1017 = vpack.c.bf16 %v1005, %v1004
      %v1018 = vpack.c.bf16 %v1007, %v1006
      %v1019 = vpack.c.bf16 %v1009, %v1008
      %v1020 = vpack.c.bf16 %v1011, %v1010
      %v1021 = vpack.c.bf16 %v1013, %v1012
      %v1022 = vpack.c.bf16 %v1015, %v1014
      %v1023 = vpack.c.bf16 %v1016, %v1016
      %v1024 = vld [vmem:[%s7] sm:$0xf]
      %v1025 = vld [vmem:[%s7 + $0x4] sm:$0xf]
      %v1026 = vld [vmem:[%s7 + $0x8] sm:$0xf]
      %v1027 = vld [vmem:[%s7 + $0xc] sm:$0xf]
      %v1028 = vld [vmem:[%s7 + $0x10] sm:$0xf]
      %v1029 = vld [vmem:[%s7 + $0x14] sm:$0xf]
      %v1030 = vld [vmem:[%s7 + $0x18] sm:$0xf]
      %v1031 = vld [vmem:[%s7 + $0x1c] sm:$0xf]
      %v1032 = vld [vmem:[%s8] sm:$0x1]
      %v1034 = vperm.slane %v1032, 0
      %v1044 = vunpack.c.l.b16 %v1024
      %v1045 = vunpack.c.l.b16 %v1025
      %v1046 = vunpack.c.l.b16 %v1026
      %v1047 = vunpack.c.l.b16 %v1027
      %v1048 = vunpack.c.l.b16 %v1028
      %v1049 = vunpack.c.l.b16 %v1029
      %v1050 = vunpack.c.l.b16 %v1030
      %v1051 = vunpack.c.l.b16 %v1031
      %v1052 = vpack.c.b16 %v1045, %v1044
      %v1053 = vpack.c.b16 %v1047, %v1046
      %v1054 = vpack.c.b16 %v1049, %v1048
      %v1055 = vpack.c.b16 %v1051, %v1050
      %vm1060 = vcmask 523264
      %v1062 = vsel %vm1060, %v1017, 0
      %v1065 = vsel %vm1060, %v1018, 0
      %v1068 = vsel %vm1060, %v1019, 0
      %v1071 = vsel %vm1060, %v1020, 0
      %v1074 = vsel %vm1060, %v1021, 0
      %v1077 = vsel %vm1060, %v1022, 0
      %v1080 = vsel %vm1060, %v1023, 0
      %1082 = vmatpush.bf16.msra.mxu0 0
      %1083 = vmatpush.bf16.msra.mxu0 0
      %1084 = vmatpush.bf16.msra.mxu0 0
      %1085 = vmatpush.bf16.msra.mxu0 0
      %1086 = vmatpush.bf16.msra.mxu0 %v1055
      %1087 = vmatpush.bf16.msra.mxu0 %v1054
      %1088 = vmatpush.bf16.msra.mxu0 %v1053
      %1089 = vmatpush.bf16.msra.mxu0 %v1052
      %1090 = vmatmul.bf16.gmra.mxu0 %v1062
      %v1091 = vpop.f32.mrf.mxu0
      %v1092 = vadd.f32 %v1034, %v1091
      %v1093 = vpop.f32.mrf.mxu0
      %v1094 = vadd.f32 %v1034, %v1093
      %1095 = vmatmul.bf16.gmra.mxu0 %v1065
      %v1096 = vpop.f32.mrf.mxu0
      %v1097 = vadd.f32 %v1034, %v1096
      %v1098 = vpop.f32.mrf.mxu0
      %v1099 = vadd.f32 %v1034, %v1098
      %1100 = vmatmul.bf16.gmra.mxu0 %v1068
      %v1101 = vpop.f32.mrf.mxu0
      %v1102 = vadd.f32 %v1034, %v1101
      %v1103 = vpop.f32.mrf.mxu0
      %v1104 = vadd.f32 %v1034, %v1103
      %1105 = vmatmul.bf16.gmra.mxu0 %v1071
      %v1106 = vpop.f32.mrf.mxu0
      %v1107 = vadd.f32 %v1034, %v1106
      %v1108 = vpop.f32.mrf.mxu0
      %v1109 = vadd.f32 %v1034, %v1108
      %1110 = vmatmul.bf16.gmra.mxu0 %v1074
      %v1111 = vpop.f32.mrf.mxu0
      %v1112 = vadd.f32 %v1034, %v1111
      %v1113 = vpop.f32.mrf.mxu0
      %v1114 = vadd.f32 %v1034, %v1113
      %1115 = vmatmul.bf16.gmra.mxu0 %v1077
      %v1116 = vpop.f32.mrf.mxu0
      %v1117 = vadd.f32 %v1034, %v1116
      %v1118 = vpop.f32.mrf.mxu0
      %v1119 = vadd.f32 %v1034, %v1118
      %1120 = vmatmul.bf16.gmra.mxu0 %v1080
      %v1121 = vpop.f32.mrf.mxu0
      %v1122 = vadd.f32 %v1034, %v1121
      %v1123 = vpop.f32.mrf.mxu0
      %1124 = vdwg.mxu0
      %v1125 = vmax.f32 %v1092, 0.0
      %v1126 = vmax.f32 %v1094, 0.0
      %v1127 = vmax.f32 %v1097, 0.0
      %v1128 = vmax.f32 %v1099, 0.0
      %v1129 = vmax.f32 %v1102, 0.0
      %v1130 = vmax.f32 %v1104, 0.0
      %v1131 = vmax.f32 %v1107, 0.0
      %v1132 = vmax.f32 %v1109, 0.0
      %v1133 = vmax.f32 %v1112, 0.0
      %v1134 = vmax.f32 %v1114, 0.0
      %v1135 = vmax.f32 %v1117, 0.0
      %v1136 = vmax.f32 %v1119, 0.0
      %v1137 = vmax.f32 %v1122, 0.0
      %v1138 = vpack.c.bf16 %v1126, %v1125
      %v1139 = vpack.c.bf16 %v1128, %v1127
      %v1140 = vpack.c.bf16 %v1130, %v1129
      %v1141 = vpack.c.bf16 %v1132, %v1131
      %v1142 = vpack.c.bf16 %v1134, %v1133
      %v1143 = vpack.c.bf16 %v1136, %v1135
      %v1144 = vpack.c.bf16 %v1137, %v1137
      %v1145 = vld [vmem:[%s9] sm:$0xf]
      %v1146 = vld [vmem:[%s9 + $0x4] sm:$0xf]
      %v1147 = vld [vmem:[%s9 + $0x8] sm:$0xf]
      %v1148 = vld [vmem:[%s9 + $0xc] sm:$0xf]
      %v1149 = vld [vmem:[%s10] sm:$0x1]
      %v1151 = vperm.slane %v1149, 0
      %v1157 = vunpack.c.l.b16 %v1145
      %v1158 = vunpack.c.l.b16 %v1146
      %v1159 = vunpack.c.l.b16 %v1147
      %v1160 = vunpack.c.l.b16 %v1148
      %v1161 = vpack.c.b16 %v1158, %v1157
      %v1162 = vpack.c.b16 %v1160, %v1159
      %vm1165 = vcmask 261120
      %v1167 = vsel %vm1165, %v1138, 0
      %v1170 = vsel %vm1165, %v1139, 0
      %v1173 = vsel %vm1165, %v1140, 0
      %v1176 = vsel %vm1165, %v1141, 0
      %v1179 = vsel %vm1165, %v1142, 0
      %v1182 = vsel %vm1165, %v1143, 0
      %v1185 = vsel %vm1165, %v1144, 0
      %1187 = vmatpush.bf16.msra.mxu0 0
      %1188 = vmatpush.bf16.msra.mxu0 0
      %1189 = vmatpush.bf16.msra.mxu0 0
      %1190 = vmatpush.bf16.msra.mxu0 0
      %1191 = vmatpush.bf16.msra.mxu0 0
      %1192 = vmatpush.bf16.msra.mxu0 0
      %1193 = vmatpush.bf16.msra.mxu0 %v1162
      %1194 = vmatpush.bf16.msra.mxu0 %v1161
      %1195 = vmatmul.bf16.gmra.mxu0 %v1167
      %v1196 = vpop.f32.mrf.mxu0
      %v1197 = vadd.f32 %v1151, %v1196
      %v1198 = vpop.f32.mrf.mxu0
      %v1199 = vadd.f32 %v1151, %v1198
      %1200 = vmatmul.bf16.gmra.mxu0 %v1170
      %v1201 = vpop.f32.mrf.mxu0
      %v1202 = vadd.f32 %v1151, %v1201
      %v1203 = vpop.f32.mrf.mxu0
      %v1204 = vadd.f32 %v1151, %v1203
      %1205 = vmatmul.bf16.gmra.mxu0 %v1173
      %v1206 = vpop.f32.mrf.mxu0
      %v1207 = vadd.f32 %v1151, %v1206
      %v1208 = vpop.f32.mrf.mxu0
      %v1209 = vadd.f32 %v1151, %v1208
      %1210 = vmatmul.bf16.gmra.mxu0 %v1176
      %v1211 = vpop.f32.mrf.mxu0
      %v1212 = vadd.f32 %v1151, %v1211
      %v1213 = vpop.f32.mrf.mxu0
      %v1214 = vadd.f32 %v1151, %v1213
      %1215 = vmatmul.bf16.gmra.mxu0 %v1179
      %v1216 = vpop.f32.mrf.mxu0
      %v1217 = vadd.f32 %v1151, %v1216
      %v1218 = vpop.f32.mrf.mxu0
      %v1219 = vadd.f32 %v1151, %v1218
      %1220 = vmatmul.bf16.gmra.mxu0 %v1182
      %v1221 = vpop.f32.mrf.mxu0
      %v1222 = vadd.f32 %v1151, %v1221
      %v1223 = vpop.f32.mrf.mxu0
      %v1224 = vadd.f32 %v1151, %v1223
      %1225 = vmatmul.bf16.gmra.mxu0 %v1185
      %v1226 = vpop.f32.mrf.mxu0
      %v1227 = vadd.f32 %v1151, %v1226
      %v1228 = vpop.f32.mrf.mxu0
      %1229 = vdwg.mxu0
      %v1230 = vmax.f32 %v1197, 0.0
      %v1231 = vmax.f32 %v1199, 0.0
      %v1232 = vmax.f32 %v1202, 0.0
      %v1233 = vmax.f32 %v1204, 0.0
      %v1234 = vmax.f32 %v1207, 0.0
      %v1235 = vmax.f32 %v1209, 0.0
      %v1236 = vmax.f32 %v1212, 0.0
      %v1237 = vmax.f32 %v1214, 0.0
      %v1238 = vmax.f32 %v1217, 0.0
      %v1239 = vmax.f32 %v1219, 0.0
      %v1240 = vmax.f32 %v1222, 0.0
      %v1241 = vmax.f32 %v1224, 0.0
      %v1242 = vmax.f32 %v1227, 0.0
      %v1243 = vpack.c.bf16 %v1231, %v1230
      %v1244 = vpack.c.bf16 %v1233, %v1232
      %v1245 = vpack.c.bf16 %v1235, %v1234
      %v1246 = vpack.c.bf16 %v1237, %v1236
      %v1247 = vpack.c.bf16 %v1239, %v1238
      %v1248 = vpack.c.bf16 %v1241, %v1240
      %v1249 = vpack.c.bf16 %v1242, %v1242
      %v1250 = vld [vmem:[%s11] sm:$0xf]
      %v1251 = vld [vmem:[%s11 + $0x4] sm:$0xf]
      %v1252 = vld [vmem:[%s12] sm:$0x1]
      %v1254 = vperm.slane %v1252, 0
      %v1258 = vunpack.c.l.b16 %v1250
      %v1259 = vunpack.c.l.b16 %v1251
      %v1260 = vpack.c.b16 %v1259, %v1258
      %vm1262 = vcmask 130048
      %v1264 = vsel %vm1262, %v1243, 0
      %v1267 = vsel %vm1262, %v1244, 0
      %v1270 = vsel %vm1262, %v1245, 0
      %v1273 = vsel %vm1262, %v1246, 0
      %v1276 = vsel %vm1262, %v1247, 0
      %v1279 = vsel %vm1262, %v1248, 0
      %v1282 = vsel %vm1262, %v1249, 0
      %1284 = vmatpush.bf16.msra.mxu0 0
      %1285 = vmatpush.bf16.msra.mxu0 0
      %1286 = vmatpush.bf16.msra.mxu0 0
      %1287 = vmatpush.bf16.msra.mxu0 0
      %1288 = vmatpush.bf16.msra.mxu0 0
      %1289 = vmatpush.bf16.msra.mxu0 0
      %1290 = vmatpush.bf16.msra.mxu0 0
      %1291 = vmatpush.bf16.msra.mxu0 %v1260
      %1292 = vmatmul.bf16.gmra.mxu0 %v1264
      %v1293 = vpop.f32.mrf.mxu0
      %v1294 = vadd.f32 %v1254, %v1293
      %v1295 = vpop.f32.mrf.mxu0
      %v1296 = vadd.f32 %v1254, %v1295
      %1297 = vmatmul.bf16.gmra.mxu0 %v1267
      %v1298 = vpop.f32.mrf.mxu0
      %v1299 = vadd.f32 %v1254, %v1298
      %v1300 = vpop.f32.mrf.mxu0
      %v1301 = vadd.f32 %v1254, %v1300
      %1302 = vmatmul.bf16.gmra.mxu0 %v1270
      %v1303 = vpop.f32.mrf.mxu0
      %v1304 = vadd.f32 %v1254, %v1303
      %v1305 = vpop.f32.mrf.mxu0
      %v1306 = vadd.f32 %v1254, %v1305
      %1307 = vmatmul.bf16.gmra.mxu0 %v1273
      %v1308 = vpop.f32.mrf.mxu0
      %v1309 = vadd.f32 %v1254, %v1308
      %v1310 = vpop.f32.mrf.mxu0
      %v1311 = vadd.f32 %v1254, %v1310
      %1312 = vmatmul.bf16.gmra.mxu0 %v1276
      %v1313 = vpop.f32.mrf.mxu0
      %v1314 = vadd.f32 %v1254, %v1313
      %v1315 = vpop.f32.mrf.mxu0
      %v1316 = vadd.f32 %v1254, %v1315
      %1317 = vmatmul.bf16.gmra.mxu0 %v1279
      %v1318 = vpop.f32.mrf.mxu0
      %v1319 = vadd.f32 %v1254, %v1318
      %v1320 = vpop.f32.mrf.mxu0
      %v1321 = vadd.f32 %v1254, %v1320
      %1322 = vmatmul.bf16.gmra.mxu0 %v1282
      %v1323 = vpop.f32.mrf.mxu0
      %v1324 = vadd.f32 %v1254, %v1323
      %v1325 = vpop.f32.mrf.mxu0
      %1326 = vdwg.mxu0
      %vm1327 = vcmask 23552
      %1328 = vst.msk [vmem:[%s442] sm:$0xff] %vm1327, %v1294
      %1329 = vst.msk [vmem:[%s442 + $0x8] sm:$0xff] %vm1327, %v1296
      %1330 = vst.msk [vmem:[%s442 + $0x10] sm:$0xff] %vm1327, %v1299
      %1331 = vst.msk [vmem:[%s442 + $0x18] sm:$0xff] %vm1327, %v1301
      %1332 = vst.msk [vmem:[%s442 + $0x20] sm:$0xff] %vm1327, %v1304
      %1333 = vst.msk [vmem:[%s442 + $0x28] sm:$0xff] %vm1327, %v1306
      %1334 = vst.msk [vmem:[%s442 + $0x30] sm:$0xff] %vm1327, %v1309
      %1335 = vst.msk [vmem:[%s442 + $0x38] sm:$0xff] %vm1327, %v1311
      %1336 = vst.msk [vmem:[%s442 + $0x40] sm:$0xff] %vm1327, %v1314
      %1337 = vst.msk [vmem:[%s442 + $0x48] sm:$0xff] %vm1327, %v1316
      %1338 = vst.msk [vmem:[%s442 + $0x50] sm:$0xff] %vm1327, %v1319
      %1339 = vst.msk [vmem:[%s442 + $0x58] sm:$0xff] %vm1327, %v1321
      %1340 = vst.msk [vmem:[%s442 + $0x60] sm:$0xff] %vm1327, %v1324
      %s1341 = smul.u32 13, %s24
      %p1342 = scmp.lt.s32.totalorder %s1341, 25
      %s1343 = scalar_select %p1342, %s1341, 25
      %s1344 = smul.addr %s1343, 8
      %s1345 = scalar_lea.vmem %s13, %s1344
      // Predicated region
      $region73: #{tpu_custom_call.1} parent=71 // pred_check
        %p1346 = pneg %p320
      $region74: #{tpu_custom_call.1} parent=71 // pred_check_branch
        %1348 = sbr.rel (%p1346) target = $region76
      $region75: #{tpu_custom_call.1} parent=71 // pred_region
        %s1349 = smul.u32 13, %s24
      $region76: #{tpu_custom_call.1} parent=71 // pred_fallthru
        _
    $region72: #{tpu_custom_call.1} parent=5 // pred_fallthru
      _
    %p1350 = scmp.le.s32.totalorder 2, %s19
    // Predicated region
    $region77: #{tpu_custom_call.1} parent=5 // pred_check
      %p1351 = pneg %p1350
    $region78: #{tpu_custom_call.1} parent=5 // pred_check_branch
      %1353 = sbr.rel (%p1351) target = $region80
    $region79: #{tpu_custom_call.1} parent=5 // pred_region
      %s1354 = ssub.s32 %s19, 2
      // Predicated region
      $region81: #{tpu_custom_call.1} parent=79 // pred_check
        %p1355 = pneg %p326
      $region82: #{tpu_custom_call.1} parent=79 // pred_check_branch
        %1357 = sbr.rel (%p1355) target = $region84
      $region83: #{tpu_custom_call.1} parent=79 // pred_region
        %s1358 = smul.u32 13, %s25
        %p1359 = scmp.lt.s32.totalorder %s1358, 25
        %s1360 = scalar_select %p1359, %s1358, 25
        %s1361 = smul.addr %s1360, 8
        %s1362 = scalar_lea.vmem %s13, %s1361
      $region84: #{tpu_custom_call.1} parent=79 // pred_fallthru
        _
    $region80: #{tpu_custom_call.1} parent=5 // pred_fallthru
      _
  $region6: #{tpu_custom_call.1} parent=0 // loop_footer
    %s23 = sadd.s32 1, %s19
  $region7: #{tpu_custom_call.1} parent=0 // loop_footer_branch
    %18 = sbr.rel target = $region3
  $region8: #{tpu_custom_call.1} parent=0 // loop_exit
    _

// kernel: tpu_custom_call.1
$region0: #{tpu_custom_call.1}
  #allocation0 [shape = 'u32[]', space=smem, size = 0x4, offset = 0x4, fixed_abs, tag = 'smem constant byte address 0x4 - core index']
  #allocation1 [shape = 'u32[72,128]{1,0:T(1,128)}', space=vmem, size = 0x9000, scoped, tag = 'internal scratch']
  %s0 = inlined_call_operand.vmem [shape: bf16[208,4], index: 0, kind: input, shape index: {}]
  %s1 = inlined_call_operand.vmem [shape: bf16[4,256], index: 1, kind: input, shape index: {}]
  %s2 = inlined_call_operand.vmem [shape: f32[1,256], index: 2, kind: input, shape index: {}]
  %s3 = inlined_call_operand.vmem [shape: bf16[256,128], index: 3, kind: input, shape index: {}]
  %s4 = inlined_call_operand.vmem [shape: f32[1,128], index: 4, kind: input, shape index: {}]
  %s5 = inlined_call_operand.vmem [shape: bf16[128,64], index: 5, kind: input, shape index: {}]
  %s6 = inlined_call_operand.vmem [shape: f32[1,64], index: 6, kind: input, shape index: {}]
  %s7 = inlined_call_operand.vmem [shape: bf16[64,32], index: 7, kind: input, shape index: {}]
  %s8 = inlined_call_operand.vmem [shape: f32[1,32], index: 8, kind: input, shape index: {}]
  %s9 = inlined_call_operand.vmem [shape: bf16[32,16], index: 9, kind: input, shape index: {}]
  %s10 = inlined_call_operand.vmem [shape: f32[1,16], index: 10, kind: input, shape index: {}]
  %s11 = inlined_call_operand.vmem [shape: bf16[16,3], index: 11, kind: input, shape index: {}]
  %s12 = inlined_call_operand.vmem [shape: f32[1,3], index: 12, kind: input, shape index: {}]
  %s13 = inlined_call_operand.vmem [shape: f32[208,3], index: 13, kind: output, shape index: {}]
  %s14 = sld [smem:[#allocation0]]
  $region85: #{tpu_custom_call.1} parent=0
    _
  %s16 = ssub.s32 1, %s14
  %s17 = scalar_select 0, %s16, %s14
  loop: start=0, step=1, limit=4
  $region2: #{tpu_custom_call.1} parent=0 // loop_pre_header
    _
  $region3: #{tpu_custom_call.1} parent=0 // loop_header
    %s19 = sphi 0, %s23
    %p20 = scmp.ge.s32.totalorder %s19, 4
    %s29 = sphi 0, %s31
    %s32 = sphi 0, %s29
    %s33 = sphi 0, %s32
    %s49 = sphi 0, %s33
    %s53 = sphi 0, %s53
    %s55 = sphi 0, %s53
    %s56 = sphi 0, %s55
    %s70 = sphi 0, %s56
    %s74 = sphi 0, %s74
    %s76 = sphi 0, %s74
    %s77 = sphi 0, %s76
    %s91 = sphi 0, %s77
    %s95 = sphi 0, %s95
    %s97 = sphi 0, %s95
    %s98 = sphi 0, %s97
    %s112 = sphi 0, %s98
    %s116 = sphi 0, %s116
    %s118 = sphi 0, %s116
    %s119 = sphi 0, %s118
    %s133 = sphi 0, %s119
    %s137 = sphi 0, %s137
    %s139 = sphi 0, %s137
    %s140 = sphi 0, %s139
    %s154 = sphi 0, %s140
    %s158 = sphi 0, %s158
    %s160 = sphi 0, %s158
    %s161 = sphi 0, %s160
    %s175 = sphi 0, %s161
    %s179 = sphi 0, %s179
    %s181 = sphi 0, %s179
    %s182 = sphi 0, %s181
    %s196 = sphi 0, %s182
    %s200 = sphi 0, %s200
    %s202 = sphi 0, %s200
    %s203 = sphi 0, %s202
    %s217 = sphi 0, %s203
    %s221 = sphi 0, %s221
    %s223 = sphi 0, %s221
    %s224 = sphi 0, %s223
    %s238 = sphi 0, %s224
    %s242 = sphi 0, %s242
    %s244 = sphi 0, %s242
    %s245 = sphi 0, %s244
    %s259 = sphi 0, %s245
    %s263 = sphi 0, %s263
    %s265 = sphi 0, %s263
    %s266 = sphi 0, %s265
    %s280 = sphi 0, %s266
    %s284 = sphi 0, %s284
    %s286 = sphi 0, %s284
    %s287 = sphi 0, %s286
    %s301 = sphi 0, %s287
    %s307 = sphi 0, %s309
    %s310 = sphi 0, %s307
    %s311 = sphi 0, %s310
    %s327 = sphi 0, %s311
  $region4: #{tpu_custom_call.1} parent=0 // loop_header_branch
    %22 = sbr.rel (%p20) target = $region8
  $region5: #{tpu_custom_call.1} parent=0 // loop_body
    %s24 = ssub.s32 %s19, 1
    %s25 = ssub.s32 %s19, 2
    %s26 = sadd.s32 %s19, 1
    %s27 = ssub.s32 %s19, %s26
    %p28 = scmp.eq.s32.totalorder %s27, 0
    %s30 = sadd.s32 %s29, 1
    %s31 = scalar_select %p28, %s29, %s30
    %p34 = pneg %p28
    %p35 = scmp.eq.s32.totalorder %s19, 1
    %p36 = por %p34, %p35
    %p37 = scmp.ne.s32.totalorder %s29, %s32
    %p38 = scmp.eq.s32.totalorder %s19, 0
    %p39 = por %p37, %p38
    %p40 = scmp.ne.s32.totalorder %s29, %s32
    %p41 = scmp.eq.s32.totalorder %s24, 1
    %p42 = por %p40, %p41
    %p43 = scmp.ne.s32.totalorder %s32, %s33
    %p44 = scmp.eq.s32.totalorder %s24, 0
    %p45 = por %p43, %p44
    %p46 = scmp.ne.s32.totalorder %s32, %s33
    %p47 = scmp.eq.s32.totalorder %s25, 1
    %p48 = por %p46, %p47
    %p50 = scmp.ne.s32.totalorder %s33, %s49
    %p51 = scmp.eq.s32.totalorder %s25, 0
    %p52 = por %p50, %p51
    %s54 = sadd.s32 %s53, 1
    %p57 = scmp.eq.s32.totalorder %s19, 1
    %p58 = scmp.ne.s32.totalorder %s53, %s55
    %p59 = scmp.eq.s32.totalorder %s19, 0
    %p60 = por %p58, %p59
    %p61 = scmp.ne.s32.totalorder %s53, %s55
    %p62 = scmp.eq.s32.totalorder %s24, 1
    %p63 = por %p61, %p62
    %p64 = scmp.ne.s32.totalorder %s55, %s56
    %p65 = scmp.eq.s32.totalorder %s24, 0
    %p66 = por %p64, %p65
    %p67 = scmp.ne.s32.totalorder %s55, %s56
    %p68 = scmp.eq.s32.totalorder %s25, 1
    %p69 = por %p67, %p68
    %p71 = scmp.ne.s32.totalorder %s56, %s70
    %p72 = scmp.eq.s32.totalorder %s25, 0
    %p73 = por %p71, %p72
    %s75 = sadd.s32 %s74, 1
    %p78 = scmp.eq.s32.totalorder %s19, 1
    %p79 = scmp.ne.s32.totalorder %s74, %s76
    %p80 = scmp.eq.s32.totalorder %s19, 0
    %p81 = por %p79, %p80
    %p82 = scmp.ne.s32.totalorder %s74, %s76
    %p83 = scmp.eq.s32.totalorder %s24, 1
    %p84 = por %p82, %p83
    %p85 = scmp.ne.s32.totalorder %s76, %s77
    %p86 = scmp.eq.s32.totalorder %s24, 0
    %p87 = por %p85, %p86
    %p88 = scmp.ne.s32.totalorder %s76, %s77
    %p89 = scmp.eq.s32.totalorder %s25, 1
    %p90 = por %p88, %p89
    %p92 = scmp.ne.s32.totalorder %s77, %s91
    %p93 = scmp.eq.s32.totalorder %s25, 0
    %p94 = por %p92, %p93
    %s96 = sadd.s32 %s95, 1
    %p99 = scmp.eq.s32.totalorder %s19, 1
    %p100 = scmp.ne.s32.totalorder %s95, %s97
    %p101 = scmp.eq.s32.totalorder %s19, 0
    %p102 = por %p100, %p101
    %p103 = scmp.ne.s32.totalorder %s95, %s97
    %p104 = scmp.eq.s32.totalorder %s24, 1
    %p105 = por %p103, %p104
    %p106 = scmp.ne.s32.totalorder %s97, %s98
    %p107 = scmp.eq.s32.totalorder %s24, 0
    %p108 = por %p106, %p107
    %p109 = scmp.ne.s32.totalorder %s97, %s98
    %p110 = scmp.eq.s32.totalorder %s25, 1
    %p111 = por %p109, %p110
    %p113 = scmp.ne.s32.totalorder %s98, %s112
    %p114 = scmp.eq.s32.totalorder %s25, 0
    %p115 = por %p113, %p114
    %s117 = sadd.s32 %s116, 1
    %p120 = scmp.eq.s32.totalorder %s19, 1
    %p121 = scmp.ne.s32.totalorder %s116, %s118
    %p122 = scmp.eq.s32.totalorder %s19, 0
    %p123 = por %p121, %p122
    %p124 = scmp.ne.s32.totalorder %s116, %s118
    %p125 = scmp.eq.s32.totalorder %s24, 1
    %p126 = por %p124, %p125
    %p127 = scmp.ne.s32.totalorder %s118, %s119
    %p128 = scmp.eq.s32.totalorder %s24, 0
    %p129 = por %p127, %p128
    %p130 = scmp.ne.s32.totalorder %s118, %s119
    %p131 = scmp.eq.s32.totalorder %s25, 1
    %p132 = por %p130, %p131
    %p134 = scmp.ne.s32.totalorder %s119, %s133
    %p135 = scmp.eq.s32.totalorder %s25, 0
    %p136 = por %p134, %p135
    %s138 = sadd.s32 %s137, 1
    %p141 = scmp.eq.s32.totalorder %s19, 1
    %p142 = scmp.ne.s32.totalorder %s137, %s139
    %p143 = scmp.eq.s32.totalorder %s19, 0
    %p144 = por %p142, %p143
    %p145 = scmp.ne.s32.totalorder %s137, %s139
    %p146 = scmp.eq.s32.totalorder %s24, 1
    %p147 = por %p145, %p146
    %p148 = scmp.ne.s32.totalorder %s139, %s140
    %p149 = scmp.eq.s32.totalorder %s24, 0
    %p150 = por %p148, %p149
    %p151 = scmp.ne.s32.totalorder %s139, %s140
    %p152 = scmp.eq.s32.totalorder %s25, 1
    %p153 = por %p151, %p152
    %p155 = scmp.ne.s32.totalorder %s140, %s154
    %p156 = scmp.eq.s32.totalorder %s25, 0
    %p157 = por %p155, %p156
    %s159 = sadd.s32 %s158, 1
    %p162 = scmp.eq.s32.totalorder %s19, 1
    %p163 = scmp.ne.s32.totalorder %s158, %s160
    %p164 = scmp.eq.s32.totalorder %s19, 0
    %p165 = por %p163, %p164
    %p166 = scmp.ne.s32.totalorder %s158, %s160
    %p167 = scmp.eq.s32.totalorder %s24, 1
    %p168 = por %p166, %p167
    %p169 = scmp.ne.s32.totalorder %s160, %s161
    %p170 = scmp.eq.s32.totalorder %s24, 0
    %p171 = por %p169, %p170
    %p172 = scmp.ne.s32.totalorder %s160, %s161
    %p173 = scmp.eq.s32.totalorder %s25, 1
    %p174 = por %p172, %p173
    %p176 = scmp.ne.s32.totalorder %s161, %s175
    %p177 = scmp.eq.s32.totalorder %s25, 0
    %p178 = por %p176, %p177
    %s180 = sadd.s32 %s179, 1
    %p183 = scmp.eq.s32.totalorder %s19, 1
    %p184 = scmp.ne.s32.totalorder %s179, %s181
    %p185 = scmp.eq.s32.totalorder %s19, 0
    %p186 = por %p184, %p185
    %p187 = scmp.ne.s32.totalorder %s179, %s181
    %p188 = scmp.eq.s32.totalorder %s24, 1
    %p189 = por %p187, %p188
    %p190 = scmp.ne.s32.totalorder %s181, %s182
    %p191 = scmp.eq.s32.totalorder %s24, 0
    %p192 = por %p190, %p191
    %p193 = scmp.ne.s32.totalorder %s181, %s182
    %p194 = scmp.eq.s32.totalorder %s25, 1
    %p195 = por %p193, %p194
    %p197 = scmp.ne.s32.totalorder %s182, %s196
    %p198 = scmp.eq.s32.totalorder %s25, 0
    %p199 = por %p197, %p198
    %s201 = sadd.s32 %s200, 1
    %p204 = scmp.eq.s32.totalorder %s19, 1
    %p205 = scmp.ne.s32.totalorder %s200, %s202
    %p206 = scmp.eq.s32.totalorder %s19, 0
    %p207 = por %p205, %p206
    %p208 = scmp.ne.s32.totalorder %s200, %s202
    %p209 = scmp.eq.s32.totalorder %s24, 1
    %p210 = por %p208, %p209
    %p211 = scmp.ne.s32.totalorder %s202, %s203
    %p212 = scmp.eq.s32.totalorder %s24, 0
    %p213 = por %p211, %p212
    %p214 = scmp.ne.s32.totalorder %s202, %s203
    %p215 = scmp.eq.s32.totalorder %s25, 1
    %p216 = por %p214, %p215
    %p218 = scmp.ne.s32.totalorder %s203, %s217
    %p219 = scmp.eq.s32.totalorder %s25, 0
    %p220 = por %p218, %p219
    %s222 = sadd.s32 %s221, 1
    %p225 = scmp.eq.s32.totalorder %s19, 1
    %p226 = scmp.ne.s32.totalorder %s221, %s223
    %p227 = scmp.eq.s32.totalorder %s19, 0
    %p228 = por %p226, %p227
    %p229 = scmp.ne.s32.totalorder %s221, %s223
    %p230 = scmp.eq.s32.totalorder %s24, 1
    %p231 = por %p229, %p230
    %p232 = scmp.ne.s32.totalorder %s223, %s224
    %p233 = scmp.eq.s32.totalorder %s24, 0
    %p234 = por %p232, %p233
    %p235 = scmp.ne.s32.totalorder %s223, %s224
    %p236 = scmp.eq.s32.totalorder %s25, 1
    %p237 = por %p235, %p236
    %p239 = scmp.ne.s32.totalorder %s224, %s238
    %p240 = scmp.eq.s32.totalorder %s25, 0
    %p241 = por %p239, %p240
    %s243 = sadd.s32 %s242, 1
    %p246 = scmp.eq.s32.totalorder %s19, 1
    %p247 = scmp.ne.s32.totalorder %s242, %s244
    %p248 = scmp.eq.s32.totalorder %s19, 0
    %p249 = por %p247, %p248
    %p250 = scmp.ne.s32.totalorder %s242, %s244
    %p251 = scmp.eq.s32.totalorder %s24, 1
    %p252 = por %p250, %p251
    %p253 = scmp.ne.s32.totalorder %s244, %s245
    %p254 = scmp.eq.s32.totalorder %s24, 0
    %p255 = por %p253, %p254
    %p256 = scmp.ne.s32.totalorder %s244, %s245
    %p257 = scmp.eq.s32.totalorder %s25, 1
    %p258 = por %p256, %p257
    %p260 = scmp.ne.s32.totalorder %s245, %s259
    %p261 = scmp.eq.s32.totalorder %s25, 0
    %p262 = por %p260, %p261
    %s264 = sadd.s32 %s263, 1
    %p267 = scmp.eq.s32.totalorder %s19, 1
    %p268 = scmp.ne.s32.totalorder %s263, %s265
    %p269 = scmp.eq.s32.totalorder %s19, 0
    %p270 = por %p268, %p269
    %p271 = scmp.ne.s32.totalorder %s263, %s265
    %p272 = scmp.eq.s32.totalorder %s24, 1
    %p273 = por %p271, %p272
    %p274 = scmp.ne.s32.totalorder %s265, %s266
    %p275 = scmp.eq.s32.totalorder %s24, 0
    %p276 = por %p274, %p275
    %p277 = scmp.ne.s32.totalorder %s265, %s266
    %p278 = scmp.eq.s32.totalorder %s25, 1
    %p279 = por %p277, %p278
    %p281 = scmp.ne.s32.totalorder %s266, %s280
    %p282 = scmp.eq.s32.totalorder %s25, 0
    %p283 = por %p281, %p282
    %s285 = sadd.s32 %s284, 1
    %p288 = scmp.eq.s32.totalorder %s19, 1
    %p289 = scmp.ne.s32.totalorder %s284, %s286
    %p290 = scmp.eq.s32.totalorder %s19, 0
    %p291 = por %p289, %p290
    %p292 = scmp.ne.s32.totalorder %s284, %s286
    %p293 = scmp.eq.s32.totalorder %s24, 1
    %p294 = por %p292, %p293
    %p295 = scmp.ne.s32.totalorder %s286, %s287
    %p296 = scmp.eq.s32.totalorder %s24, 0
    %p297 = por %p295, %p296
    %p298 = scmp.ne.s32.totalorder %s286, %s287
    %p299 = scmp.eq.s32.totalorder %s25, 1
    %p300 = por %p298, %p299
    %p302 = scmp.ne.s32.totalorder %s287, %s301
    %p303 = scmp.eq.s32.totalorder %s25, 0
    %p304 = por %p302, %p303
    %s305 = ssub.s32 %s19, %s26
    %p306 = scmp.eq.s32.totalorder %s305, 0
    %s308 = sadd.s32 %s307, 1
    %s309 = scalar_select %p306, %s307, %s308
    %p312 = pneg %p306
    %p313 = scmp.eq.s32.totalorder %s19, 1
    %p314 = por %p312, %p313
    %p315 = scmp.ne.s32.totalorder %s307, %s310
    %p316 = scmp.eq.s32.totalorder %s19, 0
    %p317 = por %p315, %p316
    %p318 = scmp.ne.s32.totalorder %s307, %s310
    %p319 = scmp.eq.s32.totalorder %s24, 1
    %p320 = por %p318, %p319
    %p321 = scmp.ne.s32.totalorder %s310, %s311
    %p322 = scmp.eq.s32.totalorder %s24, 0
    %p323 = por %p321, %p322
    %p324 = scmp.ne.s32.totalorder %s310, %s311
    %p325 = scmp.eq.s32.totalorder %s25, 1
    %p326 = por %p324, %p325
    %p328 = scmp.ne.s32.totalorder %s311, %s327
    %p329 = scmp.eq.s32.totalorder %s25, 0
    %p330 = por %p328, %p329
    %p331 = scmp.le.s32.totalorder 1, %s19
    %p332 = scmp.lt.s32.totalorder %s19, 3
    %p333 = pnand %p331, %p332
    %p334 = pneg %p333
    // Predicated region
    $region9: #{tpu_custom_call.1} parent=5 // pred_check
      _
    $region10: #{tpu_custom_call.1} parent=5 // pred_check_branch
      %336 = sbr.rel (%p333) target = $region12
    $region11: #{tpu_custom_call.1} parent=5 // pred_region
      %s337 = ssub.s32 %s19, 1
      // Predicated region
      $region13: #{tpu_custom_call.1} parent=11 // pred_check
        %p338 = pneg %p66
      $region14: #{tpu_custom_call.1} parent=11 // pred_check_branch
        %340 = sbr.rel (%p338) target = $region16
      $region15: #{tpu_custom_call.1} parent=11 // pred_region
        _
      $region16: #{tpu_custom_call.1} parent=11 // pred_fallthru
        _
      // Predicated region
      $region17: #{tpu_custom_call.1} parent=11 // pred_check
        %p341 = pneg %p87
      $region18: #{tpu_custom_call.1} parent=11 // pred_check_branch
        %343 = sbr.rel (%p341) target = $region20
      $region19: #{tpu_custom_call.1} parent=11 // pred_region
        _
      $region20: #{tpu_custom_call.1} parent=11 // pred_fallthru
        _
      // Predicated region
      $region21: #{tpu_custom_call.1} parent=11 // pred_check
        %p344 = pneg %p108
      $region22: #{tpu_custom_call.1} parent=11 // pred_check_branch
        %346 = sbr.rel (%p344) target = $region24
      $region23: #{tpu_custom_call.1} parent=11 // pred_region
        _
      $region24: #{tpu_custom_call.1} parent=11 // pred_fallthru
        _
      // Predicated region
      $region25: #{tpu_custom_call.1} parent=11 // pred_check
        %p347 = pneg %p129
      $region26: #{tpu_custom_call.1} parent=11 // pred_check_branch
        %349 = sbr.rel (%p347) target = $region28
      $region27: #{tpu_custom_call.1} parent=11 // pred_region
        _
      $region28: #{tpu_custom_call.1} parent=11 // pred_fallthru
        _
      // Predicated region
      $region29: #{tpu_custom_call.1} parent=11 // pred_check
        %p350 = pneg %p150
      $region30: #{tpu_custom_call.1} parent=11 // pred_check_branch
        %352 = sbr.rel (%p350) target = $region32
      $region31: #{tpu_custom_call.1} parent=11 // pred_region
        _
      $region32: #{tpu_custom_call.1} parent=11 // pred_fallthru
        _
      // Predicated region
      $region33: #{tpu_custom_call.1} parent=11 // pred_check
        %p353 = pneg %p171
      $region34: #{tpu_custom_call.1} parent=11 // pred_check_branch
        %355 = sbr.rel (%p353) target = $region36
      $region35: #{tpu_custom_call.1} parent=11 // pred_region
        _
      $region36: #{tpu_custom_call.1} parent=11 // pred_fallthru
        _
      // Predicated region
      $region37: #{tpu_custom_call.1} parent=11 // pred_check
        %p356 = pneg %p192
      $region38: #{tpu_custom_call.1} parent=11 // pred_check_branch
        %358 = sbr.rel (%p356) target = $region40
      $region39: #{tpu_custom_call.1} parent=11 // pred_region
        _
      $region40: #{tpu_custom_call.1} parent=11 // pred_fallthru
        _
      // Predicated region
      $region41: #{tpu_custom_call.1} parent=11 // pred_check
        %p359 = pneg %p213
      $region42: #{tpu_custom_call.1} parent=11 // pred_check_branch
        %361 = sbr.rel (%p359) target = $region44
      $region43: #{tpu_custom_call.1} parent=11 // pred_region
        _
      $region44: #{tpu_custom_call.1} parent=11 // pred_fallthru
        _
      // Predicated region
      $region45: #{tpu_custom_call.1} parent=11 // pred_check
        %p362 = pneg %p234
      $region46: #{tpu_custom_call.1} parent=11 // pred_check_branch
        %364 = sbr.rel (%p362) target = $region48
      $region47: #{tpu_custom_call.1} parent=11 // pred_region
        _
      $region48: #{tpu_custom_call.1} parent=11 // pred_fallthru
        _
      // Predicated region
      $region49: #{tpu_custom_call.1} parent=11 // pred_check
        %p365 = pneg %p255
      $region50: #{tpu_custom_call.1} parent=11 // pred_check_branch
        %367 = sbr.rel (%p365) target = $region52
      $region51: #{tpu_custom_call.1} parent=11 // pred_region
        _
      $region52: #{tpu_custom_call.1} parent=11 // pred_fallthru
        _
      // Predicated region
      $region53: #{tpu_custom_call.1} parent=11 // pred_check
        %p368 = pneg %p276
      $region54: #{tpu_custom_call.1} parent=11 // pred_check_branch
        %370 = sbr.rel (%p368) target = $region56
      $region55: #{tpu_custom_call.1} parent=11 // pred_region
        _
      $region56: #{tpu_custom_call.1} parent=11 // pred_fallthru
        _
      // Predicated region
      $region57: #{tpu_custom_call.1} parent=11 // pred_check
        %p371 = pneg %p297
      $region58: #{tpu_custom_call.1} parent=11 // pred_check_branch
        %373 = sbr.rel (%p371) target = $region60
      $region59: #{tpu_custom_call.1} parent=11 // pred_region
        _
      $region60: #{tpu_custom_call.1} parent=11 // pred_fallthru
        _
    $region12: #{tpu_custom_call.1} parent=5 // pred_fallthru
      _
    %p374 = scmp.lt.s32.totalorder %s19, 2
    // Predicated region
    $region61: #{tpu_custom_call.1} parent=5 // pred_check
      %p375 = pneg %p374
    $region62: #{tpu_custom_call.1} parent=5 // pred_check_branch
      %377 = sbr.rel (%p375) target = $region64
    $region63: #{tpu_custom_call.1} parent=5 // pred_region
      // Predicated region
      $region65: #{tpu_custom_call.1} parent=63 // pred_check
        %p378 = pneg %p39
      $region66: #{tpu_custom_call.1} parent=63 // pred_check_branch
        %380 = sbr.rel (%p378) target = $region68
      $region67: #{tpu_custom_call.1} parent=63 // pred_region
        %s381 = smul.u32 13, %s19
        %p382 = scmp.lt.s32.totalorder %s381, 25
        %s383 = scalar_select %p382, %s381, 25
        %s384 = smul.addr %s383, 4
        %s385 = scalar_lea.vmem %s0, %s384
        %s386 = smul.u32 13, %s19
      $region68: #{tpu_custom_call.1} parent=63 // pred_fallthru
        _
    $region64: #{tpu_custom_call.1} parent=5 // pred_fallthru
      _
    %p387 = scmp.le.s32.totalorder 1, %s19
    %p388 = scmp.lt.s32.totalorder %s19, 3
    %p389 = pnand %p387, %p388
    %p390 = pneg %p389
    // Predicated region
    $region69: #{tpu_custom_call.1} parent=5 // pred_check
      _
    $region70: #{tpu_custom_call.1} parent=5 // pred_check_branch
      %392 = sbr.rel (%p389) target = $region72
    $region71: #{tpu_custom_call.1} parent=5 // pred_region
      %s393 = ssub.s32 %s19, 1
      %s394 = smul.u32 13, %s24
      %p395 = scmp.lt.s32.totalorder %s394, 25
      %s396 = scalar_select %p395, %s394, 25
      %s397 = smul.addr %s396, 4
      %s398 = scalar_lea.vmem %s0, %s397
      %p399 = pneg %p45
      %p400 = pneg %p42
      %p401 = pneg %p66
      %p402 = pneg %p63
      %p403 = pneg %p87
      %p404 = pneg %p84
      %p405 = pneg %p108
      %p406 = pneg %p105
      %p407 = pneg %p129
      %p408 = pneg %p126
      %p409 = pneg %p150
      %p410 = pneg %p147
      %p411 = pneg %p171
      %p412 = pneg %p168
      %p413 = pneg %p192
      %p414 = pneg %p189
      %p415 = pneg %p213
      %p416 = pneg %p210
      %p417 = pneg %p234
      %p418 = pneg %p231
      %p419 = pneg %p255
      %p420 = pneg %p252
      %p421 = pneg %p276
      %p422 = pneg %p273
      %p423 = pneg %p297
      %p424 = pneg %p294
      %p425 = pneg %p323
      %p426 = pneg %p320
      %s427 = smul.u32 13, %s24
      %p428 = scmp.lt.s32.totalorder %s427, 25
      %s429 = scalar_select %p428, %s427, 25
      %s430 = smul.addr %s429, 8
      %s431 = scalar_lea.vmem %s13, %s430
      %s432 = smul.u32 13, %s24
      %p433 = scmp.lt.s32.totalorder %s432, 25
      %s434 = scalar_select %p433, %s432, 25
      %s435 = smul.addr %s434, 4
      %s436 = scalar_lea.vmem %s0, %s435
      %s437 = smul.u32 13, %s24
      %s438 = smul.u32 13, %s24
      %p439 = scmp.lt.s32.totalorder %s438, 25
      %s440 = scalar_select %p439, %s438, 25
      %s441 = smul.addr %s440, 8
      %s442 = scalar_lea.vmem %s13, %s441
      %s443 = smul.u32 13, %s24
      %v445 = vld [vmem:[%s436] sm:$0xf]
      %v446 = vld [vmem:[%s436 + $0x4] sm:$0xf]
      %v447 = vld [vmem:[%s436 + $0x8] sm:$0xf]
      %v448 = vld [vmem:[%s436 + $0xc] sm:$0xf]
      %v449 = vld [vmem:[%s436 + $0x10] sm:$0xf]
      %v450 = vld [vmem:[%s436 + $0x14] sm:$0xf]
      %v451 = vld [vmem:[%s436 + $0x18] sm:$0xf]
      %v452 = vld [vmem:[%s436 + $0x1c] sm:$0xf]
      %v453 = vld [vmem:[%s436 + $0x20] sm:$0xf]
      %v454 = vld [vmem:[%s436 + $0x24] sm:$0xf]
      %v455 = vld [vmem:[%s436 + $0x28] sm:$0xf]
      %v456 = vld [vmem:[%s436 + $0x2c] sm:$0xf]
      %v457 = vld [vmem:[%s436 + $0x30] sm:$0xf]
      %v458 = vld [vmem:[%s1] sm:$0xf]
      %v459 = vld [vmem:[%s2] sm:$0x3]
      %v461 = vperm.slane %v459, 0
      %v462 = vperm.slane %v459, 1
      %v478 = vunpack.c.l.b16 %v445
      %v479 = vunpack.c.l.b16 %v446
      %v480 = vunpack.c.l.b16 %v447
      %v481 = vunpack.c.l.b16 %v448
      %v482 = vunpack.c.l.b16 %v449
      %v483 = vunpack.c.l.b16 %v450
      %v484 = vunpack.c.l.b16 %v451
      %v485 = vunpack.c.l.b16 %v452
      %v486 = vunpack.c.l.b16 %v453
      %v487 = vunpack.c.l.b16 %v454
      %v488 = vunpack.c.l.b16 %v455
      %v489 = vunpack.c.l.b16 %v456
      %v490 = vunpack.c.l.b16 %v457
      %v491 = vpack.c.b16 %v479, %v478
      %v492 = vpack.c.b16 %v481, %v480
      %v493 = vpack.c.b16 %v483, %v482
      %v494 = vpack.c.b16 %v485, %v484
      %v495 = vpack.c.b16 %v487, %v486
      %v496 = vpack.c.b16 %v489, %v488
      %v497 = vpack.c.b16 %v490, %v490
      %499 = vst [vmem:[#allocation1] ss:$4 sm:$0xff] %v458
      %v500 = vld.sshfl [vmem:[#allocation1] sm:$0xff pattern:$0x73625140]
      %v501 = vld.sshfl [vmem:[#allocation1 + $0x8] sm:$0xff pattern:$0x73625140]
      %vm502 = vcmask 31744
      %v504 = vsel %vm502, %v491, 0
      %v507 = vsel %vm502, %v492, 0
      %v510 = vsel %vm502, %v493, 0
      %v513 = vsel %vm502, %v494, 0
      %v516 = vsel %vm502, %v495, 0
      %v519 = vsel %vm502, %v496, 0
      %v522 = vsel %vm502, %v497, 0
      %vm524 = vcmask 1041408
      %v525 = vsel %vm524, %v500, 0
      %v527 = vsel %vm524, %v501, 0
      %529 = vmatpush.bf16.msra.mxu0 0
      %530 = vmatpush.bf16.msra.mxu0 0
      %531 = vmatpush.bf16.msra.mxu0 0
      %532 = vmatpush.bf16.msra.mxu0 0
      %533 = vmatpush.bf16.msra.mxu0 0
      %534 = vmatpush.bf16.msra.mxu0 0
      %535 = vmatpush.bf16.msra.mxu0 0
      %536 = vmatpush.bf16.msra.mxu0 %v525
      %537 = vmatmul.bf16.gmra.mxu0 %v504
      %v538 = vpop.f32.mrf.mxu0
      %v539 = vadd.f32 %v461, %v538
      %v540 = vpop.f32.mrf.mxu0
      %v541 = vadd.f32 %v461, %v540
      %542 = vmatmul.bf16.gmra.mxu0 %v507
      %v543 = vpop.f32.mrf.mxu0
      %v544 = vadd.f32 %v461, %v543
      %v545 = vpop.f32.mrf.mxu0
      %v546 = vadd.f32 %v461, %v545
      %547 = vmatmul.bf16.gmra.mxu0 %v510
      %v548 = vpop.f32.mrf.mxu0
      %v549 = vadd.f32 %v461, %v548
      %v550 = vpop.f32.mrf.mxu0
      %v551 = vadd.f32 %v461, %v550
      %552 = vmatmul.bf16.gmra.mxu0 %v513
      %v553 = vpop.f32.mrf.mxu0
      %v554 = vadd.f32 %v461, %v553
      %v555 = vpop.f32.mrf.mxu0
      %v556 = vadd.f32 %v461, %v555
      %557 = vmatmul.bf16.gmra.mxu0 %v516
      %v558 = vpop.f32.mrf.mxu0
      %v559 = vadd.f32 %v461, %v558
      %v560 = vpop.f32.mrf.mxu0
      %v561 = vadd.f32 %v461, %v560
      %562 = vmatmul.bf16.gmra.mxu0 %v519
      %v563 = vpop.f32.mrf.mxu0
      %v564 = vadd.f32 %v461, %v563
      %v565 = vpop.f32.mrf.mxu0
      %v566 = vadd.f32 %v461, %v565
      %567 = vmatmul.bf16.gmra.mxu0 %v522
      %v568 = vpop.f32.mrf.mxu0
      %v569 = vadd.f32 %v461, %v568
      %v570 = vpop.f32.mrf.mxu0
      %571 = vdwg.mxu0
      %572 = vmatpush.bf16.msra.mxu0 0
      %573 = vmatpush.bf16.msra.mxu0 0
      %574 = vmatpush.bf16.msra.mxu0 0
      %575 = vmatpush.bf16.msra.mxu0 0
      %576 = vmatpush.bf16.msra.mxu0 0
      %577 = vmatpush.bf16.msra.mxu0 0
      %578 = vmatpush.bf16.msra.mxu0 0
      %579 = vmatpush.bf16.msra.mxu0 %v527
      %580 = vmatmul.bf16.gmra.mxu0 %v504
      %v581 = vpop.f32.mrf.mxu0
      %v582 = vadd.f32 %v462, %v581
      %v583 = vpop.f32.mrf.mxu0
      %v584 = vadd.f32 %v462, %v583
      %585 = vmatmul.bf16.gmra.mxu0 %v507
      %v586 = vpop.f32.mrf.mxu0
      %v587 = vadd.f32 %v462, %v586
      %v588 = vpop.f32.mrf.mxu0
      %v589 = vadd.f32 %v462, %v588
      %590 = vmatmul.bf16.gmra.mxu0 %v510
      %v591 = vpop.f32.mrf.mxu0
      %v592 = vadd.f32 %v462, %v591
      %v593 = vpop.f32.mrf.mxu0
      %v594 = vadd.f32 %v462, %v593
      %595 = vmatmul.bf16.gmra.mxu0 %v513
      %v596 = vpop.f32.mrf.mxu0
      %v597 = vadd.f32 %v462, %v596
      %v598 = vpop.f32.mrf.mxu0
      %v599 = vadd.f32 %v462, %v598
      %600 = vmatmul.bf16.gmra.mxu0 %v516
      %v601 = vpop.f32.mrf.mxu0
      %v602 = vadd.f32 %v462, %v601
      %v603 = vpop.f32.mrf.mxu0
      %v604 = vadd.f32 %v462, %v603
      %605 = vmatmul.bf16.gmra.mxu0 %v519
      %v606 = vpop.f32.mrf.mxu0
      %v607 = vadd.f32 %v462, %v606
      %v608 = vpop.f32.mrf.mxu0
      %v609 = vadd.f32 %v462, %v608
      %610 = vmatmul.bf16.gmra.mxu0 %v522
      %v611 = vpop.f32.mrf.mxu0
      %v612 = vadd.f32 %v462, %v611
      %v613 = vpop.f32.mrf.mxu0
      %614 = vdwg.mxu0
      %v615 = vmax.f32 %v539, 0.0
      %v616 = vmax.f32 %v582, 0.0
      %v617 = vmax.f32 %v541, 0.0
      %v618 = vmax.f32 %v584, 0.0
      %v619 = vmax.f32 %v544, 0.0
      %v620 = vmax.f32 %v587, 0.0
      %v621 = vmax.f32 %v546, 0.0
      %v622 = vmax.f32 %v589, 0.0
      %v623 = vmax.f32 %v549, 0.0
      %v624 = vmax.f32 %v592, 0.0
      %v625 = vmax.f32 %v551, 0.0
      %v626 = vmax.f32 %v594, 0.0
      %v627 = vmax.f32 %v554, 0.0
      %v628 = vmax.f32 %v597, 0.0
      %v629 = vmax.f32 %v556, 0.0
      %v630 = vmax.f32 %v599, 0.0
      %v631 = vmax.f32 %v559, 0.0
      %v632 = vmax.f32 %v602, 0.0
      %v633 = vmax.f32 %v561, 0.0
      %v634 = vmax.f32 %v604, 0.0
      %v635 = vmax.f32 %v564, 0.0
      %v636 = vmax.f32 %v607, 0.0
      %v637 = vmax.f32 %v566, 0.0
      %v638 = vmax.f32 %v609, 0.0
      %v639 = vmax.f32 %v569, 0.0
      %v640 = vmax.f32 %v612, 0.0
      %v641 = vpack.c.bf16 %v617, %v615
      %v642 = vpack.c.bf16 %v618, %v616
      %v643 = vpack.c.bf16 %v621, %v619
      %v644 = vpack.c.bf16 %v622, %v620
      %v645 = vpack.c.bf16 %v625, %v623
      %v646 = vpack.c.bf16 %v626, %v624
      %v647 = vpack.c.bf16 %v629, %v627
      %v648 = vpack.c.bf16 %v630, %v628
      %v649 = vpack.c.bf16 %v633, %v631
      %v650 = vpack.c.bf16 %v634, %v632
      %v651 = vpack.c.bf16 %v637, %v635
      %v652 = vpack.c.bf16 %v638, %v636
      %v653 = vpack.c.bf16 %v639, %v639
      %v654 = vpack.c.bf16 %v640, %v640
      %v655 = vld [vmem:[%s3] sm:$0xf]
      %v656 = vld [vmem:[%s3 + $0x4] sm:$0xf]
      %v657 = vld [vmem:[%s3 + $0x8] sm:$0xf]
      %v658 = vld [vmem:[%s3 + $0xc] sm:$0xf]
      %v659 = vld [vmem:[%s3 + $0x10] sm:$0xf]
      %v660 = vld [vmem:[%s3 + $0x14] sm:$0xf]
      %v661 = vld [vmem:[%s3 + $0x18] sm:$0xf]
      %v662 = vld [vmem:[%s3 + $0x1c] sm:$0xf]
      %v663 = vld [vmem:[%s3 + $0x20] sm:$0xf]
      %v664 = vld [vmem:[%s3 + $0x24] sm:$0xf]
      %v665 = vld [vmem:[%s3 + $0x28] sm:$0xf]
      %v666 = vld [vmem:[%s3 + $0x2c] sm:$0xf]
      %v667 = vld [vmem:[%s3 + $0x30] sm:$0xf]
      %v668 = vld [vmem:[%s3 + $0x34] sm:$0xf]
      %v669 = vld [vmem:[%s3 + $0x38] sm:$0xf]
      %v670 = vld [vmem:[%s3 + $0x3c] sm:$0xf]
      %v671 = vld [vmem:[%s3 + $0x40] sm:$0xf]
      %v672 = vld [vmem:[%s3 + $0x44] sm:$0xf]
      %v673 = vld [vmem:[%s3 + $0x48] sm:$0xf]
      %v674 = vld [vmem:[%s3 + $0x4c] sm:$0xf]
      %v675 = vld [vmem:[%s3 + $0x50] sm:$0xf]
      %v676 = vld [vmem:[%s3 + $0x54] sm:$0xf]
      %v677 = vld [vmem:[%s3 + $0x58] sm:$0xf]
      %v678 = vld [vmem:[%s3 + $0x5c] sm:$0xf]
      %v679 = vld [vmem:[%s3 + $0x60] sm:$0xf]
      %v680 = vld [vmem:[%s3 + $0x64] sm:$0xf]
      %v681 = vld [vmem:[%s3 + $0x68] sm:$0xf]
      %v682 = vld [vmem:[%s3 + $0x6c] sm:$0xf]
      %v683 = vld [vmem:[%s3 + $0x70] sm:$0xf]
      %v684 = vld [vmem:[%s3 + $0x74] sm:$0xf]
      %v685 = vld [vmem:[%s3 + $0x78] sm:$0xf]
      %v686 = vld [vmem:[%s3 + $0x7c] sm:$0xf]
      %v687 = vld [vmem:[%s4] sm:$0x1]
      %v689 = vperm.slane %v687, 0
      %v723 = vunpack.c.l.b16 %v655
      %v724 = vunpack.c.l.b16 %v656
      %v725 = vunpack.c.l.b16 %v657
      %v726 = vunpack.c.l.b16 %v658
      %v727 = vunpack.c.l.b16 %v659
      %v728 = vunpack.c.l.b16 %v660
      %v729 = vunpack.c.l.b16 %v661
      %v730 = vunpack.c.l.b16 %v662
      %v731 = vunpack.c.l.b16 %v663
      %v732 = vunpack.c.l.b16 %v664
      %v733 = vunpack.c.l.b16 %v665
      %v734 = vunpack.c.l.b16 %v666
      %v735 = vunpack.c.l.b16 %v667
      %v736 = vunpack.c.l.b16 %v668
      %v737 = vunpack.c.l.b16 %v669
      %v738 = vunpack.c.l.b16 %v670
      %v739 = vunpack.c.l.b16 %v671
      %v740 = vunpack.c.l.b16 %v672
      %v741 = vunpack.c.l.b16 %v673
      %v742 = vunpack.c.l.b16 %v674
      %v743 = vunpack.c.l.b16 %v675
      %v744 = vunpack.c.l.b16 %v676
      %v745 = vunpack.c.l.b16 %v677
      %v746 = vunpack.c.l.b16 %v678
      %v747 = vunpack.c.l.b16 %v679
      %v748 = vunpack.c.l.b16 %v680
      %v749 = vunpack.c.l.b16 %v681
      %v750 = vunpack.c.l.b16 %v682
      %v751 = vunpack.c.l.b16 %v683
      %v752 = vunpack.c.l.b16 %v684
      %v753 = vunpack.c.l.b16 %v685
      %v754 = vunpack.c.l.b16 %v686
      %v755 = vpack.c.b16 %v724, %v723
      %v756 = vpack.c.b16 %v726, %v725
      %v757 = vpack.c.b16 %v728, %v727
      %v758 = vpack.c.b16 %v730, %v729
      %v759 = vpack.c.b16 %v732, %v731
      %v760 = vpack.c.b16 %v734, %v733
      %v761 = vpack.c.b16 %v736, %v735
      %v762 = vpack.c.b16 %v738, %v737
      %v763 = vpack.c.b16 %v740, %v739
      %v764 = vpack.c.b16 %v742, %v741
      %v765 = vpack.c.b16 %v744, %v743
      %v766 = vpack.c.b16 %v746, %v745
      %v767 = vpack.c.b16 %v748, %v747
      %v768 = vpack.c.b16 %v750, %v749
      %v769 = vpack.c.b16 %v752, %v751
      %v770 = vpack.c.b16 %v754, %v753
      %787 = vmatpush.bf16.msra.mxu0 %v762
      %788 = vmatpush.bf16.msra.mxu0 %v761
      %789 = vmatpush.bf16.msra.mxu0 %v760
      %790 = vmatpush.bf16.msra.mxu0 %v759
      %791 = vmatpush.bf16.msra.mxu0 %v758
      %792 = vmatpush.bf16.msra.mxu0 %v757
      %793 = vmatpush.bf16.msra.mxu0 %v756
      %794 = vmatpush.bf16.msra.mxu0 %v755
      %795 = vmatmul.bf16.gmra.mxu0 %v641
      %v796 = vpop.f32.mrf.mxu0
      %v797 = vadd.f32 %v689, %v796
      %v798 = vpop.f32.mrf.mxu0
      %v799 = vadd.f32 %v689, %v798
      %800 = vmatmul.bf16.gmra.mxu0 %v643
      %v801 = vpop.f32.mrf.mxu0
      %v802 = vadd.f32 %v689, %v801
      %v803 = vpop.f32.mrf.mxu0
      %v804 = vadd.f32 %v689, %v803
      %805 = vmatmul.bf16.gmra.mxu0 %v645
      %v806 = vpop.f32.mrf.mxu0
      %v807 = vadd.f32 %v689, %v806
      %v808 = vpop.f32.mrf.mxu0
      %v809 = vadd.f32 %v689, %v808
      %810 = vmatmul.bf16.gmra.mxu0 %v647
      %v811 = vpop.f32.mrf.mxu0
      %v812 = vadd.f32 %v689, %v811
      %v813 = vpop.f32.mrf.mxu0
      %v814 = vadd.f32 %v689, %v813
      %815 = vmatmul.bf16.gmra.mxu0 %v649
      %v816 = vpop.f32.mrf.mxu0
      %v817 = vadd.f32 %v689, %v816
      %v818 = vpop.f32.mrf.mxu0
      %v819 = vadd.f32 %v689, %v818
      %820 = vmatmul.bf16.gmra.mxu0 %v651
      %v821 = vpop.f32.mrf.mxu0
      %v822 = vadd.f32 %v689, %v821
      %v823 = vpop.f32.mrf.mxu0
      %v824 = vadd.f32 %v689, %v823
      %825 = vmatmul.bf16.gmra.mxu0 %v653
      %v826 = vpop.f32.mrf.mxu0
      %v827 = vadd.f32 %v689, %v826
      %v828 = vpop.f32.mrf.mxu0
      %829 = vdwg.mxu0
      %830 = vmatpush.bf16.msra.mxu0 %v770
      %831 = vmatpush.bf16.msra.mxu0 %v769
      %832 = vmatpush.bf16.msra.mxu0 %v768
      %833 = vmatpush.bf16.msra.mxu0 %v767
      %834 = vmatpush.bf16.msra.mxu0 %v766
      %835 = vmatpush.bf16.msra.mxu0 %v765
      %836 = vmatpush.bf16.msra.mxu0 %v764
      %837 = vmatpush.bf16.msra.mxu0 %v763
      %838 = vmatmul.bf16.gmra.mxu0 %v642
      %v839 = vpop.f32.mrf.mxu0
      %v840 = vadd.f32 %v797, %v839
      %v841 = vpop.f32.mrf.mxu0
      %v842 = vadd.f32 %v799, %v841
      %843 = vmatmul.bf16.gmra.mxu0 %v644
      %v844 = vpop.f32.mrf.mxu0
      %v845 = vadd.f32 %v802, %v844
      %v846 = vpop.f32.mrf.mxu0
      %v847 = vadd.f32 %v804, %v846
      %848 = vmatmul.bf16.gmra.mxu0 %v646
      %v849 = vpop.f32.mrf.mxu0
      %v850 = vadd.f32 %v807, %v849
      %v851 = vpop.f32.mrf.mxu0
      %v852 = vadd.f32 %v809, %v851
      %853 = vmatmul.bf16.gmra.mxu0 %v648
      %v854 = vpop.f32.mrf.mxu0
      %v855 = vadd.f32 %v812, %v854
      %v856 = vpop.f32.mrf.mxu0
      %v857 = vadd.f32 %v814, %v856
      %858 = vmatmul.bf16.gmra.mxu0 %v650
      %v859 = vpop.f32.mrf.mxu0
      %v860 = vadd.f32 %v817, %v859
      %v861 = vpop.f32.mrf.mxu0
      %v862 = vadd.f32 %v819, %v861
      %863 = vmatmul.bf16.gmra.mxu0 %v652
      %v864 = vpop.f32.mrf.mxu0
      %v865 = vadd.f32 %v822, %v864
      %v866 = vpop.f32.mrf.mxu0
      %v867 = vadd.f32 %v824, %v866
      %868 = vmatmul.bf16.gmra.mxu0 %v654
      %v869 = vpop.f32.mrf.mxu0
      %v870 = vadd.f32 %v827, %v869
      %v871 = vpop.f32.mrf.mxu0
      %872 = vdwg.mxu0
      %v873 = vmax.f32 %v840, 0.0
      %v874 = vmax.f32 %v842, 0.0
      %v875 = vmax.f32 %v845, 0.0
      %v876 = vmax.f32 %v847, 0.0
      %v877 = vmax.f32 %v850, 0.0
      %v878 = vmax.f32 %v852, 0.0
      %v879 = vmax.f32 %v855, 0.0
      %v880 = vmax.f32 %v857, 0.0
      %v881 = vmax.f32 %v860, 0.0
      %v882 = vmax.f32 %v862, 0.0
      %v883 = vmax.f32 %v865, 0.0
      %v884 = vmax.f32 %v867, 0.0
      %v885 = vmax.f32 %v870, 0.0
      %v886 = vpack.c.bf16 %v874, %v873
      %v887 = vpack.c.bf16 %v876, %v875
      %v888 = vpack.c.bf16 %v878, %v877
      %v889 = vpack.c.bf16 %v880, %v879
      %v890 = vpack.c.bf16 %v882, %v881
      %v891 = vpack.c.bf16 %v884, %v883
      %v892 = vpack.c.bf16 %v885, %v885
      %v893 = vld [vmem:[%s5] sm:$0xf]
      %v894 = vld [vmem:[%s5 + $0x4] sm:$0xf]
      %v895 = vld [vmem:[%s5 + $0x8] sm:$0xf]
      %v896 = vld [vmem:[%s5 + $0xc] sm:$0xf]
      %v897 = vld [vmem:[%s5 + $0x10] sm:$0xf]
      %v898 = vld [vmem:[%s5 + $0x14] sm:$0xf]
      %v899 = vld [vmem:[%s5 + $0x18] sm:$0xf]
      %v900 = vld [vmem:[%s5 + $0x1c] sm:$0xf]
      %v901 = vld [vmem:[%s5 + $0x20] sm:$0xf]
      %v902 = vld [vmem:[%s5 + $0x24] sm:$0xf]
      %v903 = vld [vmem:[%s5 + $0x28] sm:$0xf]
      %v904 = vld [vmem:[%s5 + $0x2c] sm:$0xf]
      %v905 = vld [vmem:[%s5 + $0x30] sm:$0xf]
      %v906 = vld [vmem:[%s5 + $0x34] sm:$0xf]
      %v907 = vld [vmem:[%s5 + $0x38] sm:$0xf]
      %v908 = vld [vmem:[%s5 + $0x3c] sm:$0xf]
      %v909 = vld [vmem:[%s6] sm:$0x1]
      %v911 = vperm.slane %v909, 0
      %v929 = vunpack.c.l.b16 %v893
      %v930 = vunpack.c.l.b16 %v894
      %v931 = vunpack.c.l.b16 %v895
      %v932 = vunpack.c.l.b16 %v896
      %v933 = vunpack.c.l.b16 %v897
      %v934 = vunpack.c.l.b16 %v898
      %v935 = vunpack.c.l.b16 %v899
      %v936 = vunpack.c.l.b16 %v900
      %v937 = vunpack.c.l.b16 %v901
      %v938 = vunpack.c.l.b16 %v902
      %v939 = vunpack.c.l.b16 %v903
      %v940 = vunpack.c.l.b16 %v904
      %v941 = vunpack.c.l.b16 %v905
      %v942 = vunpack.c.l.b16 %v906
      %v943 = vunpack.c.l.b16 %v907
      %v944 = vunpack.c.l.b16 %v908
      %v945 = vpack.c.b16 %v930, %v929
      %v946 = vpack.c.b16 %v932, %v931
      %v947 = vpack.c.b16 %v934, %v933
      %v948 = vpack.c.b16 %v936, %v935
      %v949 = vpack.c.b16 %v938, %v937
      %v950 = vpack.c.b16 %v940, %v939
      %v951 = vpack.c.b16 %v942, %v941
      %v952 = vpack.c.b16 %v944, %v943
      %961 = vmatpush.bf16.msra.mxu0 %v952
      %962 = vmatpush.bf16.msra.mxu0 %v951
      %963 = vmatpush.bf16.msra.mxu0 %v950
      %964 = vmatpush.bf16.msra.mxu0 %v949
      %965 = vmatpush.bf16.msra.mxu0 %v948
      %966 = vmatpush.bf16.msra.mxu0 %v947
      %967 = vmatpush.bf16.msra.mxu0 %v946
      %968 = vmatpush.bf16.msra.mxu0 %v945
      %969 = vmatmul.bf16.gmra.mxu0 %v886
      %v970 = vpop.f32.mrf.mxu0
      %v971 = vadd.f32 %v911, %v970
      %v972 = vpop.f32.mrf.mxu0
      %v973 = vadd.f32 %v911, %v972
      %974 = vmatmul.bf16.gmra.mxu0 %v887
      %v975 = vpop.f32.mrf.mxu0
      %v976 = vadd.f32 %v911, %v975
      %v977 = vpop.f32.mrf.mxu0
      %v978 = vadd.f32 %v911, %v977
      %979 = vmatmul.bf16.gmra.mxu0 %v888
      %v980 = vpop.f32.mrf.mxu0
      %v981 = vadd.f32 %v911, %v980
      %v982 = vpop.f32.mrf.mxu0
      %v983 = vadd.f32 %v911, %v982
      %984 = vmatmul.bf16.gmra.mxu0 %v889
      %v985 = vpop.f32.mrf.mxu0
      %v986 = vadd.f32 %v911, %v985
      %v987 = vpop.f32.mrf.mxu0
      %v988 = vadd.f32 %v911, %v987
      %989 = vmatmul.bf16.gmra.mxu0 %v890
      %v990 = vpop.f32.mrf.mxu0
      %v991 = vadd.f32 %v911, %v990
      %v992 = vpop.f32.mrf.mxu0
      %v993 = vadd.f32 %v911, %v992
      %994 = vmatmul.bf16.gmra.mxu0 %v891
      %v995 = vpop.f32.mrf.mxu0
      %v996 = vadd.f32 %v911, %v995
      %v997 = vpop.f32.mrf.mxu0
      %v998 = vadd.f32 %v911, %v997
      %999 = vmatmul.bf16.gmra.mxu0 %v892
      %v1000 = vpop.f32.mrf.mxu0
      %v1001 = vadd.f32 %v911, %v1000
      %v1002 = vpop.f32.mrf.mxu0
      %1003 = vdwg.mxu0
      %v1004 = vmax.f32 %v971, 0.0
      %v1005 = vmax.f32 %v973, 0.0
      %v1006 = vmax.f32 %v976, 0.0
      %v1007 = vmax.f32 %v978, 0.0
      %v1008 = vmax.f32 %v981, 0.0
      %v1009 = vmax.f32 %v983, 0.0
      %v1010 = vmax.f32 %v986, 0.0
      %v1011 = vmax.f32 %v988, 0.0
      %v1012 = vmax.f32 %v991, 0.0
      %v1013 = vmax.f32 %v993, 0.0
      %v1014 = vmax.f32 %v996, 0.0
      %v1015 = vmax.f32 %v998, 0.0
      %v1016 = vmax.f32 %v1001, 0.0
      %v1017 = vpack.c.bf16 %v1005, %v1004
      %v1018 = vpack.c.bf16 %v1007, %v1006
      %v1019 = vpack.c.bf16 %v1009, %v1008
      %v1020 = vpack.c.bf16 %v1011, %v1010
      %v1021 = vpack.c.bf16 %v1013, %v1012
      %v1022 = vpack.c.bf16 %v1015, %v1014
      %v1023 = vpack.c.bf16 %v1016, %v1016
      %v1024 = vld [vmem:[%s7] sm:$0xf]
      %v1025 = vld [vmem:[%s7 + $0x4] sm:$0xf]
      %v1026 = vld [vmem:[%s7 + $0x8] sm:$0xf]
      %v1027 = vld [vmem:[%s7 + $0xc] sm:$0xf]
      %v1028 = vld [vmem:[%s7 + $0x10] sm:$0xf]
      %v1029 = vld [vmem:[%s7 + $0x14] sm:$0xf]
      %v1030 = vld [vmem:[%s7 + $0x18] sm:$0xf]
      %v1031 = vld [vmem:[%s7 + $0x1c] sm:$0xf]
      %v1032 = vld [vmem:[%s8] sm:$0x1]
      %v1034 = vperm.slane %v1032, 0
      %v1044 = vunpack.c.l.b16 %v1024
      %v1045 = vunpack.c.l.b16 %v1025
      %v1046 = vunpack.c.l.b16 %v1026
      %v1047 = vunpack.c.l.b16 %v1027
      %v1048 = vunpack.c.l.b16 %v1028
      %v1049 = vunpack.c.l.b16 %v1029
      %v1050 = vunpack.c.l.b16 %v1030
      %v1051 = vunpack.c.l.b16 %v1031
      %v1052 = vpack.c.b16 %v1045, %v1044
      %v1053 = vpack.c.b16 %v1047, %v1046
      %v1054 = vpack.c.b16 %v1049, %v1048
      %v1055 = vpack.c.b16 %v1051, %v1050
      %vm1060 = vcmask 523264
      %v1062 = vsel %vm1060, %v1017, 0
      %v1065 = vsel %vm1060, %v1018, 0
      %v1068 = vsel %vm1060, %v1019, 0
      %v1071 = vsel %vm1060, %v1020, 0
      %v1074 = vsel %vm1060, %v1021, 0
      %v1077 = vsel %vm1060, %v1022, 0
      %v1080 = vsel %vm1060, %v1023, 0
      %1082 = vmatpush.bf16.msra.mxu0 0
      %1083 = vmatpush.bf16.msra.mxu0 0
      %1084 = vmatpush.bf16.msra.mxu0 0
      %1085 = vmatpush.bf16.msra.mxu0 0
      %1086 = vmatpush.bf16.msra.mxu0 %v1055
      %1087 = vmatpush.bf16.msra.mxu0 %v1054
      %1088 = vmatpush.bf16.msra.mxu0 %v1053
      %1089 = vmatpush.bf16.msra.mxu0 %v1052
      %1090 = vmatmul.bf16.gmra.mxu0 %v1062
      %v1091 = vpop.f32.mrf.mxu0
      %v1092 = vadd.f32 %v1034, %v1091
      %v1093 = vpop.f32.mrf.mxu0
      %v1094 = vadd.f32 %v1034, %v1093
      %1095 = vmatmul.bf16.gmra.mxu0 %v1065
      %v1096 = vpop.f32.mrf.mxu0
      %v1097 = vadd.f32 %v1034, %v1096
      %v1098 = vpop.f32.mrf.mxu0
      %v1099 = vadd.f32 %v1034, %v1098
      %1100 = vmatmul.bf16.gmra.mxu0 %v1068
      %v1101 = vpop.f32.mrf.mxu0
      %v1102 = vadd.f32 %v1034, %v1101
      %v1103 = vpop.f32.mrf.mxu0
      %v1104 = vadd.f32 %v1034, %v1103
      %1105 = vmatmul.bf16.gmra.mxu0 %v1071
      %v1106 = vpop.f32.mrf.mxu0
      %v1107 = vadd.f32 %v1034, %v1106
      %v1108 = vpop.f32.mrf.mxu0
      %v1109 = vadd.f32 %v1034, %v1108
      %1110 = vmatmul.bf16.gmra.mxu0 %v1074
      %v1111 = vpop.f32.mrf.mxu0
      %v1112 = vadd.f32 %v1034, %v1111
      %v1113 = vpop.f32.mrf.mxu0
      %v1114 = vadd.f32 %v1034, %v1113
      %1115 = vmatmul.bf16.gmra.mxu0 %v1077
      %v1116 = vpop.f32.mrf.mxu0
      %v1117 = vadd.f32 %v1034, %v1116
      %v1118 = vpop.f32.mrf.mxu0
      %v1119 = vadd.f32 %v1034, %v1118
      %1120 = vmatmul.bf16.gmra.mxu0 %v1080
      %v1121 = vpop.f32.mrf.mxu0
      %v1122 = vadd.f32 %v1034, %v1121
      %v1123 = vpop.f32.mrf.mxu0
      %1124 = vdwg.mxu0
      %v1125 = vmax.f32 %v1092, 0.0
      %v1126 = vmax.f32 %v1094, 0.0
      %v1127 = vmax.f32 %v1097, 0.0
      %v1128 = vmax.f32 %v1099, 0.0
      %v1129 = vmax.f32 %v1102, 0.0
      %v1130 = vmax.f32 %v1104, 0.0
      %v1131 = vmax.f32 %v1107, 0.0
      %v1132 = vmax.f32 %v1109, 0.0
      %v1133 = vmax.f32 %v1112, 0.0
      %v1134 = vmax.f32 %v1114, 0.0
      %v1135 = vmax.f32 %v1117, 0.0
      %v1136 = vmax.f32 %v1119, 0.0
      %v1137 = vmax.f32 %v1122, 0.0
      %v1138 = vpack.c.bf16 %v1126, %v1125
      %v1139 = vpack.c.bf16 %v1128, %v1127
      %v1140 = vpack.c.bf16 %v1130, %v1129
      %v1141 = vpack.c.bf16 %v1132, %v1131
      %v1142 = vpack.c.bf16 %v1134, %v1133
      %v1143 = vpack.c.bf16 %v1136, %v1135
      %v1144 = vpack.c.bf16 %v1137, %v1137
      %v1145 = vld [vmem:[%s9] sm:$0xf]
      %v1146 = vld [vmem:[%s9 + $0x4] sm:$0xf]
      %v1147 = vld [vmem:[%s9 + $0x8] sm:$0xf]
      %v1148 = vld [vmem:[%s9 + $0xc] sm:$0xf]
      %v1149 = vld [vmem:[%s10] sm:$0x1]
      %v1151 = vperm.slane %v1149, 0
      %v1157 = vunpack.c.l.b16 %v1145
      %v1158 = vunpack.c.l.b16 %v1146
      %v1159 = vunpack.c.l.b16 %v1147
      %v1160 = vunpack.c.l.b16 %v1148
      %v1161 = vpack.c.b16 %v1158, %v1157
      %v1162 = vpack.c.b16 %v1160, %v1159
      %vm1165 = vcmask 261120
      %v1167 = vsel %vm1165, %v1138, 0
      %v1170 = vsel %vm1165, %v1139, 0
      %v1173 = vsel %vm1165, %v1140, 0
      %v1176 = vsel %vm1165, %v1141, 0
      %v1179 = vsel %vm1165, %v1142, 0
      %v1182 = vsel %vm1165, %v1143, 0
      %v1185 = vsel %vm1165, %v1144, 0
      %1187 = vmatpush.bf16.msra.mxu0 0
      %1188 = vmatpush.bf16.msra.mxu0 0
      %1189 = vmatpush.bf16.msra.mxu0 0
      %1190 = vmatpush.bf16.msra.mxu0 0
      %1191 = vmatpush.bf16.msra.mxu0 0
      %1192 = vmatpush.bf16.msra.mxu0 0
      %1193 = vmatpush.bf16.msra.mxu0 %v1162
      %1194 = vmatpush.bf16.msra.mxu0 %v1161
      %1195 = vmatmul.bf16.gmra.mxu0 %v1167
      %v1196 = vpop.f32.mrf.mxu0
      %v1197 = vadd.f32 %v1151, %v1196
      %v1198 = vpop.f32.mrf.mxu0
      %v1199 = vadd.f32 %v1151, %v1198
      %1200 = vmatmul.bf16.gmra.mxu0 %v1170
      %v1201 = vpop.f32.mrf.mxu0
      %v1202 = vadd.f32 %v1151, %v1201
      %v1203 = vpop.f32.mrf.mxu0
      %v1204 = vadd.f32 %v1151, %v1203
      %1205 = vmatmul.bf16.gmra.mxu0 %v1173
      %v1206 = vpop.f32.mrf.mxu0
      %v1207 = vadd.f32 %v1151, %v1206
      %v1208 = vpop.f32.mrf.mxu0
      %v1209 = vadd.f32 %v1151, %v1208
      %1210 = vmatmul.bf16.gmra.mxu0 %v1176
      %v1211 = vpop.f32.mrf.mxu0
      %v1212 = vadd.f32 %v1151, %v1211
      %v1213 = vpop.f32.mrf.mxu0
      %v1214 = vadd.f32 %v1151, %v1213
      %1215 = vmatmul.bf16.gmra.mxu0 %v1179
      %v1216 = vpop.f32.mrf.mxu0
      %v1217 = vadd.f32 %v1151, %v1216
      %v1218 = vpop.f32.mrf.mxu0
      %v1219 = vadd.f32 %v1151, %v1218
      %1220 = vmatmul.bf16.gmra.mxu0 %v1182
      %v1221 = vpop.f32.mrf.mxu0
      %v1222 = vadd.f32 %v1151, %v1221
      %v1223 = vpop.f32.mrf.mxu0
      %v1224 = vadd.f32 %v1151, %v1223
      %1225 = vmatmul.bf16.gmra.mxu0 %v1185
      %v1226 = vpop.f32.mrf.mxu0
      %v1227 = vadd.f32 %v1151, %v1226
      %v1228 = vpop.f32.mrf.mxu0
      %1229 = vdwg.mxu0
      %v1230 = vmax.f32 %v1197, 0.0
      %v1231 = vmax.f32 %v1199, 0.0
      %v1232 = vmax.f32 %v1202, 0.0
      %v1233 = vmax.f32 %v1204, 0.0
      %v1234 = vmax.f32 %v1207, 0.0
      %v1235 = vmax.f32 %v1209, 0.0
      %v1236 = vmax.f32 %v1212, 0.0
      %v1237 = vmax.f32 %v1214, 0.0
      %v1238 = vmax.f32 %v1217, 0.0
      %v1239 = vmax.f32 %v1219, 0.0
      %v1240 = vmax.f32 %v1222, 0.0
      %v1241 = vmax.f32 %v1224, 0.0
      %v1242 = vmax.f32 %v1227, 0.0
      %v1243 = vpack.c.bf16 %v1231, %v1230
      %v1244 = vpack.c.bf16 %v1233, %v1232
      %v1245 = vpack.c.bf16 %v1235, %v1234
      %v1246 = vpack.c.bf16 %v1237, %v1236
      %v1247 = vpack.c.bf16 %v1239, %v1238
      %v1248 = vpack.c.bf16 %v1241, %v1240
      %v1249 = vpack.c.bf16 %v1242, %v1242
      %v1250 = vld [vmem:[%s11] sm:$0xf]
      %v1251 = vld [vmem:[%s11 + $0x4] sm:$0xf]
      %v1252 = vld [vmem:[%s12] sm:$0x1]
      %v1254 = vperm.slane %v1252, 0
      %v1258 = vunpack.c.l.b16 %v1250
      %v1259 = vunpack.c.l.b16 %v1251
      %v1260 = vpack.c.b16 %v1259, %v1258
      %vm1262 = vcmask 130048
      %v1264 = vsel %vm1262, %v1243, 0
      %v1267 = vsel %vm1262, %v1244, 0
      %v1270 = vsel %vm1262, %v1245, 0
      %v1273 = vsel %vm1262, %v1246, 0
      %v1276 = vsel %vm1262, %v1247, 0
      %v1279 = vsel %vm1262, %v1248, 0
      %v1282 = vsel %vm1262, %v1249, 0
      %1284 = vmatpush.bf16.msra.mxu0 0
      %1285 = vmatpush.bf16.msra.mxu0 0
      %1286 = vmatpush.bf16.msra.mxu0 0
      %1287 = vmatpush.bf16.msra.mxu0 0
      %1288 = vmatpush.bf16.msra.mxu0 0
      %1289 = vmatpush.bf16.msra.mxu0 0
      %1290 = vmatpush.bf16.msra.mxu0 0
      %1291 = vmatpush.bf16.msra.mxu0 %v1260
      %1292 = vmatmul.bf16.gmra.mxu0 %v1264
      %v1293 = vpop.f32.mrf.mxu0
      %v1294 = vadd.f32 %v1254, %v1293
      %v1295 = vpop.f32.mrf.mxu0
      %v1296 = vadd.f32 %v1254, %v1295
      %1297 = vmatmul.bf16.gmra.mxu0 %v1267
      %v1298 = vpop.f32.mrf.mxu0
      %v1299 = vadd.f32 %v1254, %v1298
      %v1300 = vpop.f32.mrf.mxu0
      %v1301 = vadd.f32 %v1254, %v1300
      %1302 = vmatmul.bf16.gmra.mxu0 %v1270
      %v1303 = vpop.f32.mrf.mxu0
      %v1304 = vadd.f32 %v1254, %v1303
      %v1305 = vpop.f32.mrf.mxu0
      %v1306 = vadd.f32 %v1254, %v1305
      %1307 = vmatmul.bf16.gmra.mxu0 %v1273
      %v1308 = vpop.f32.mrf.mxu0
      %v1309 = vadd.f32 %v1254, %v1308
      %v1310 = vpop.f32.mrf.mxu0
      %v1311 = vadd.f32 %v1254, %v1310
      %1312 = vmatmul.bf16.gmra.mxu0 %v1276
      %v1313 = vpop.f32.mrf.mxu0
      %v1314 = vadd.f32 %v1254, %v1313
      %v1315 = vpop.f32.mrf.mxu0
      %v1316 = vadd.f32 %v1254, %v1315
      %1317 = vmatmul.bf16.gmra.mxu0 %v1279
      %v1318 = vpop.f32.mrf.mxu0
      %v1319 = vadd.f32 %v1254, %v1318
      %v1320 = vpop.f32.mrf.mxu0
      %v1321 = vadd.f32 %v1254, %v1320
      %1322 = vmatmul.bf16.gmra.mxu0 %v1282
      %v1323 = vpop.f32.mrf.mxu0
      %v1324 = vadd.f32 %v1254, %v1323
      %v1325 = vpop.f32.mrf.mxu0
      %1326 = vdwg.mxu0
      %vm1327 = vcmask 23552
      %1328 = vst.msk [vmem:[%s442] sm:$0xff] %vm1327, %v1294
      %1329 = vst.msk [vmem:[%s442 + $0x8] sm:$0xff] %vm1327, %v1296
      %1330 = vst.msk [vmem:[%s442 + $0x10] sm:$0xff] %vm1327, %v1299
      %1331 = vst.msk [vmem:[%s442 + $0x18] sm:$0xff] %vm1327, %v1301
      %1332 = vst.msk [vmem:[%s442 + $0x20] sm:$0xff] %vm1327, %v1304
      %1333 = vst.msk [vmem:[%s442 + $0x28] sm:$0xff] %vm1327, %v1306
      %1334 = vst.msk [vmem:[%s442 + $0x30] sm:$0xff] %vm1327, %v1309
      %1335 = vst.msk [vmem:[%s442 + $0x38] sm:$0xff] %vm1327, %v1311
      %1336 = vst.msk [vmem:[%s442 + $0x40] sm:$0xff] %vm1327, %v1314
      %1337 = vst.msk [vmem:[%s442 + $0x48] sm:$0xff] %vm1327, %v1316
      %1338 = vst.msk [vmem:[%s442 + $0x50] sm:$0xff] %vm1327, %v1319
      %1339 = vst.msk [vmem:[%s442 + $0x58] sm:$0xff] %vm1327, %v1321
      %1340 = vst.msk [vmem:[%s442 + $0x60] sm:$0xff] %vm1327, %v1324
      %s1341 = smul.u32 13, %s24
      %p1342 = scmp.lt.s32.totalorder %s1341, 25
      %s1343 = scalar_select %p1342, %s1341, 25
      %s1344 = smul.addr %s1343, 8
      %s1345 = scalar_lea.vmem %s13, %s1344
      // Predicated region
      $region73: #{tpu_custom_call.1} parent=71 // pred_check
        %p1346 = pneg %p320
      $region74: #{tpu_custom_call.1} parent=71 // pred_check_branch
        %1348 = sbr.rel (%p1346) target = $region76
      $region75: #{tpu_custom_call.1} parent=71 // pred_region
        %s1349 = smul.u32 13, %s24
      $region76: #{tpu_custom_call.1} parent=71 // pred_fallthru
        _
    $region72: #{tpu_custom_call.1} parent=5 // pred_fallthru
      _
    %p1350 = scmp.le.s32.totalorder 2, %s19
    // Predicated region
    $region77: #{tpu_custom_call.1} parent=5 // pred_check
      %p1351 = pneg %p1350
    $region78: #{tpu_custom_call.1} parent=5 // pred_check_branch
      %1353 = sbr.rel (%p1351) target = $region80
    $region79: #{tpu_custom_call.1} parent=5 // pred_region
      %s1354 = ssub.s32 %s19, 2
      // Predicated region
      $region81: #{tpu_custom_call.1} parent=79 // pred_check
        %p1355 = pneg %p326
      $region82: #{tpu_custom_call.1} parent=79 // pred_check_branch
        %1357 = sbr.rel (%p1355) target = $region84
      $region83: #{tpu_custom_call.1} parent=79 // pred_region
        %s1358 = smul.u32 13, %s25
        %p1359 = scmp.lt.s32.totalorder %s1358, 25
        %s1360 = scalar_select %p1359, %s1358, 25
        %s1361 = smul.addr %s1360, 8
        %s1362 = scalar_lea.vmem %s13, %s1361
      $region84: #{tpu_custom_call.1} parent=79 // pred_fallthru
        _
    $region80: #{tpu_custom_call.1} parent=5 // pred_fallthru
      _
  $region6: #{tpu_custom_call.1} parent=0 // loop_footer
    %s23 = sadd.s32 1, %s19
  $region7: #{tpu_custom_call.1} parent=0 // loop_footer_branch
    %18 = sbr.rel target = $region3
  $region8: #{tpu_custom_call.1} parent=0 // loop_exit
    _

</llo_original>
